<compile_context>
chip_gen: v6e
topology: v6e:2x2x1
jax: 0.10.0
libtpu: 0.0.40
codegen_flags: <defaults>
</compile_context>

<pallas_src>
import functools

import jax
import jax.numpy as jnp
from jax.experimental import pallas as pl
from jax.experimental.pallas import tpu as pltpu  # noqa: F401  (TPU backend import)

# ---- model sizes (from the PyTorch script) ----
MAX_WORD_LEN = 8
CHAR_EMB_DIM = 3
WORD_EMB_DIM = 6
HIDDEN_DIM = 6
TAGSET_SIZE = 3
VOCAB_SIZE = 9     # unique words in training_data
CHAR_SIZE = 26     # synthetic char vocab
SENT_LEN = 5       # "The dog ate the apple"

# ---- kernel layout constants ----
CHAR_BATCH = 8                 # sentence length padded to the 8-sublane vreg height
GATE_LANES = 128               # each LSTM gate gets its own 128-lane block
SLAB_LANES = 4 * GATE_LANES    # 512: i | f | g | o

# 8-row-aligned row offsets of each parameter inside the packed (72, 512) weight slab
R_CWX, R_CWH, R_CB = 0, 8, 16
R_WWXW, R_WWXC, R_WWH, R_WB = 24, 32, 40, 48
R_TAGW, R_TAGB = 56, 64
SLAB_ROWS = 72

DATA_W = 8                                           # lanes of the activation slab
DATA_ROWS = MAX_WORD_LEN * CHAR_BATCH + CHAR_BATCH   # 64 char rows + 8 word rows = 72


def lstm_tagger_kernel(data_ref, slab_ref, out_ref, *, seq_len, max_word_len):
    """data_ref: (72, 8) activations; slab_ref: (72, 512) packed params; out_ref: (8, 128)."""
    f32 = jnp.float32
    C, W, H, T = CHAR_EMB_DIM, WORD_EMB_DIM, HIDDEN_DIM, TAGSET_SIZE
    S, L = seq_len, max_word_len
    SB, GL, NL = CHAR_BATCH, GATE_LANES, SLAB_LANES

    # ---------- hoisted, one-time parameter loads (static ref slices) ----------
    cWx = slab_ref[R_CWX:R_CWX + C, :]                        # (C, 512)
    cb = slab_ref[R_CB:R_CB + 1, :]                           # (1, 512)
    # char-LSTM recurrent rows, pre-broadcast across the padded batch (hoisted: no
    # per-iteration broadcast_in_dim inside the unrolled loop).
    cWh_b = [jnp.broadcast_to(slab_ref[R_CWH + k:R_CWH + k + 1, :], (SB, NL))
             for k in range(C)]
    wWxw = slab_ref[R_WWXW:R_WWXW + W, :]                     # (W, 512)
    wWxc = slab_ref[R_WWXC:R_WWXC + C, :]                     # (C, 512)
    wb = slab_ref[R_WB:R_WB + 1, :]                           # (1, 512)
    wWh_r = [slab_ref[R_WWH + k:R_WWH + k + 1, :] for k in range(H)]   # H x (1, 512)
    tagW = slab_ref[R_TAGW:R_TAGW + H, :GL]                   # (H, 128), lanes >= T are 0
    tagB = slab_ref[R_TAGB:R_TAGB + 1, :GL]                   # (1, 128)

    char_x = data_ref[0:L * SB, 0:C]                          # (L*8, C) time-major
    word_x = data_ref[L * SB:L * SB + SB, 0:W]                # (8, W)

    # ---------------- char-level LSTM: L steps, batch = 8 (padded) ----------------
    # Batched input-path gate pre-activations for all L steps (MXU, off the serial path).
    cxg = jnp.dot(char_x, cWx, preferred_element_type=f32) + cb       # (L*8, 512)

    h = jnp.zeros((SB, GL), f32)
    c = jnp.zeros((SB, GL), f32)
    for t in range(L):                                        # fully unrolled
        # Recurrent contribution on the VPU: sum_k h[:, k] * Wh_row_k  (no MXU round-trip).
        rec = jnp.broadcast_to(h[:, 0:1], (SB, NL)) * cWh_b[0]
        for k in range(1, C):
            rec = rec + jnp.broadcast_to(h[:, k:k + 1], (SB, NL)) * cWh_b[k]
        g = cxg[t * SB:(t + 1) * SB, :] + rec                 # 8-sublane-aligned slice
        i_g = jax.nn.sigmoid(g[:, 0 * GL:1 * GL])             # vreg-boundary gate slices
        f_g = jax.nn.sigmoid(g[:, 1 * GL:2 * GL])
        g_g = jnp.tanh(g[:, 2 * GL:3 * GL])
        o_g = jax.nn.sigmoid(g[:, 3 * GL:4 * GL])
        c = f_g * c + i_g * g_g
        h = o_g * jnp.tanh(c)
    char_last = h                                             # (8, 128); lanes >= C are 0

    # ---------------- word-level LSTM: S steps, batch = 1 ----------------
    # concat(word_emb, char_last) folded into split input weights; batched over all S steps.
    wxg = (jnp.dot(word_x, wWxw, preferred_element_type=f32)
           + jnp.dot(char_last[:, :C], wWxc, preferred_element_type=f32)
           + wb)                                              # (8, 512); rows >= S unused

    wh = jnp.zeros((1, GL), f32)
    wc = jnp.zeros((1, GL), f32)
    hs = []
    for t in range(S):                                        # fully unrolled
        rec = jnp.broadcast_to(wh[:, 0:1], (1, NL)) * wWh_r[0]
        for k in range(1, H):
            rec = rec + jnp.broadcast_to(wh[:, k:k + 1], (1, NL)) * wWh_r[k]
        g = wxg[t:t + 1, :] + rec
        i_g = jax.nn.sigmoid(g[:, 0 * GL:1 * GL])
        f_g = jax.nn.sigmoid(g[:, 1 * GL:2 * GL])
        g_g = jnp.tanh(g[:, 2 * GL:3 * GL])
        o_g = jax.nn.sigmoid(g[:, 3 * GL:4 * GL])
        wc = f_g * wc + i_g * g_g
        wh = o_g * jnp.tanh(wc)
        hs.append(wh)

    # ------------- fused head: hidden2tag + masked log_softmax, single full-tile store -------------
    hs_all = jnp.concatenate(hs + [jnp.zeros((SB - S, GL), f32)], axis=0)   # (8, 128)
    logits = jnp.dot(hs_all[:, :H], tagW, preferred_element_type=f32) + tagB  # (8, 128)
    lane = jax.lax.broadcasted_iota(jnp.int32, (SB, GL), 1)
    masked = jnp.where(lane < T, logits, jnp.float32(-1e30))
    m = jnp.max(masked, axis=-1, keepdims=True)
    lse = m + jnp.log(jnp.sum(jnp.exp(masked - m), axis=-1, keepdims=True))
    out_ref[...] = logits - lse                               # unmasked (8, 128) store


def make_params(key):
    """Deterministic init in PyTorch shapes, plus the packed (72, 512) kernel weight slab."""
    C, W, H, T = CHAR_EMB_DIM, WORD_EMB_DIM, HIDDEN_DIM, TAGSET_SIZE
    ks = jax.random.split(key, 12)
    f32 = jnp.float32

    word_emb = jax.random.normal(ks[0], (VOCAB_SIZE, W), f32) * 0.3
    char_emb = jax.random.normal(ks[1], (CHAR_SIZE, C), f32) * 0.3

    # char LSTM (PyTorch layout: weight_ih (4C, C), weight_hh (4C, C), biases (4C,))
    c_wih = jax.random.normal(ks[2], (4 * C, C), f32) * 0.3
    c_whh = jax.random.normal(ks[3], (4 * C, C), f32) * 0.3
    c_bih = jax.random.normal(ks[4], (4 * C,), f32) * 0.3
    c_bhh = jax.random.normal(ks[5], (4 * C,), f32) * 0.3

    # word LSTM: input dim = W + C, hidden H
    w_wih = jax.random.normal(ks[6], (4 * H, W + C), f32) * 0.3
    w_whh = jax.random.normal(ks[7], (4 * H, H), f32) * 0.3
    w_bih = jax.random.normal(ks[8], (4 * H,), f32) * 0.3
    w_bhh = jax.random.normal(ks[9], (4 * H,), f32) * 0.3

    # hidden2tag
    lin_w = jax.random.normal(ks[10], (T, H), f32) * 0.3
    lin_b = jax.random.normal(ks[11], (T,), f32) * 0.3

    # --- pack into 128-lane-aligned gate blocks (gate order i, f, g, o) ---
    def gate_cols(w_t, out_dim):
        # w_t: (in, 4*out) PyTorch-transposed fused weight -> (in, 512), gate k in
        # lanes [128k, 128k + out_dim), zero elsewhere.
        blk = jnp.zeros((w_t.shape[0], SLAB_LANES), f32)
        for k in range(4):
            blk = blk.at[:, k * GATE_LANES:k * GATE_LANES + out_dim].set(
                w_t[:, k * out_dim:(k + 1) * out_dim])
        return blk

    def gate_cols_vec(b, out_dim):
        blk = jnp.zeros((1, SLAB_LANES), f32)
        for k in range(4):
            blk = blk.at[0, k * GATE_LANES:k * GATE_LANES + out_dim].set(
                b[k * out_dim:(k + 1) * out_dim])
        return blk

    wWx = w_wih.T                                             # (W+C, 4H)
    slab = jnp.zeros((SLAB_ROWS, SLAB_LANES), f32)
    slab = slab.at[R_CWX:R_CWX + C, :].set(gate_cols(c_wih.T, C))
    slab = slab.at[R_CWH:R_CWH + C, :].set(gate_cols(c_whh.T, C))
    slab = slab.at[R_CB:R_CB + 1, :].set(gate_cols_vec(c_bih + c_bhh, C))
    slab = slab.at[R_WWXW:R_WWXW + W, :].set(gate_cols(wWx[:W, :], H))
    slab = slab.at[R_WWXC:R_WWXC + C, :].set(gate_cols(wWx[W:, :], H))
    slab = slab.at[R_WWH:R_WWH + H, :].set(gate_cols(w_whh.T, H))
    slab = slab.at[R_WB:R_WB + 1, :].set(gate_cols_vec(w_bih + w_bhh, H))
    slab = slab.at[R_TAGW:R_TAGW + H, :T].set(lin_w.T)
    slab = slab.at[R_TAGB:R_TAGB + 1, :T].set(lin_b.reshape(1, T))

    raw = dict(c_wih=c_wih, c_whh=c_whh, c_bih=c_bih, c_bhh=c_bhh,
               w_wih=w_wih, w_whh=w_whh, w_bih=w_bih, w_bhh=w_bhh,
               lin_w=lin_w, lin_b=lin_b)

    return dict(word_emb=word_emb, char_emb=char_emb, slab=slab, raw=raw)


@functools.partial(jax.jit, static_argnames=("max_word_len",))
def lstm_tagger_forward(sentence_word, sentence_char, max_word_len, params):
    C, W, T = CHAR_EMB_DIM, WORD_EMB_DIM, TAGSET_SIZE
    S = sentence_word.shape[0]
    L = max_word_len
    f32 = jnp.float32

    # Glue (plain JAX): time-major char gather (reorder tiny int indices, not embeddings),
    # pad the char batch S -> 8, and pack both activations into a single (72, 8) slab.
    idx_tm = sentence_char.reshape(S, L).T                              # (L, S)
    char_e = params["char_emb"][idx_tm]                                 # (L, S, C)
    char_pad = jnp.zeros((L, CHAR_BATCH, C), f32).at[:, :S, :].set(char_e)
    word_e = params["word_emb"][sentence_word]                          # (S, W)
    word_pad = jnp.zeros((CHAR_BATCH, W), f32).at[:S, :].set(word_e)

    data = jnp.zeros((DATA_ROWS, DATA_W), f32)
    data = data.at[:L * CHAR_BATCH, :C].set(char_pad.reshape(L * CHAR_BATCH, C))
    data = data.at[L * CHAR_BATCH:, :W].set(word_pad)

    kernel = functools.partial(lstm_tagger_kernel, seq_len=S, max_word_len=L)
    out = pl.pallas_call(
        kernel,
        out_shape=jax.ShapeDtypeStruct((CHAR_BATCH, GATE_LANES), f32),
    )(data, params["slab"])
    return out[:S, :T]


def reference_forward(sentence_word, sentence_char, max_word_len, params):
    """Pure-JAX reference mirroring the PyTorch forward, using raw PyTorch-layout weights."""
    C, W, H = CHAR_EMB_DIM, WORD_EMB_DIM, HIDDEN_DIM
    S = sentence_word.shape[0]
    raw = params["raw"]

    char_e = (params["char_emb"][sentence_char]
              .reshape(S, max_word_len, C).transpose(1, 0, 2))          # (L, S, C)
    word_e = params["word_emb"][sentence_word]                          # (S, W)

    def cell(x, h, c, w_ih, w_hh, b_ih, b_hh):
        gates = x @ w_ih.T + h @ w_hh.T + b_ih + b_hh                   # (B, 4H)
        Hd = h.shape[1]
        i = jax.nn.sigmoid(gates[:, 0:Hd])
        f = jax.nn.sigmoid(gates[:, Hd:2 * Hd])
        g = jnp.tanh(gates[:, 2 * Hd:3 * Hd])
        o = jax.nn.sigmoid(gates[:, 3 * Hd:4 * Hd])
        c_new = f * c + i * g
        return o * jnp.tanh(c_new), c_new

    h = jnp.zeros((S, C)); c = jnp.zeros((S, C))
    for t in range(max_word_len):
        h, c = cell(char_e[t], h, c, raw["c_wih"], raw["c_whh"], raw["c_bih"], raw["c_bhh"])
    char_last = h

    x_cat = jnp.concatenate([word_e, char_last], axis=1)                # (S, W+C)
    wh = jnp.zeros((1, H)); wc = jnp.zeros((1, H))
    rows = []
    for t in range(S):
        wh, wc = cell(x_cat[t:t + 1], wh, wc,
                      raw["w_wih"], raw["w_whh"], raw["w_bih"], raw["w_bhh"])
        rows.append(wh)
    hs = jnp.concatenate(rows, axis=0)                                  # (S, H)
    logits = hs @ raw["lin_w"].T + raw["lin_b"]
    return jax.nn.log_softmax(logits, axis=-1)


if __name__ == "__main__":
    key = jax.random.PRNGKey(0)
    pkey, wkey, ckey = jax.random.split(key, 3)
    params = make_params(pkey)

    # "The dog ate the apple" -> 5 word indices; chars padded to MAX_WORD_LEN per word.
    sentence_word = jax.random.randint(wkey, (SENT_LEN,), 0, VOCAB_SIZE, dtype=jnp.int32)
    sentence_char = jax.random.randint(ckey, (SENT_LEN * MAX_WORD_LEN,), 0, CHAR_SIZE,
                                       dtype=jnp.int32)

    tag_scores = lstm_tagger_forward(sentence_word, sentence_char, MAX_WORD_LEN, params)
    tag_scores = jax.block_until_ready(tag_scores)

    ref = reference_forward(sentence_word, sentence_char, MAX_WORD_LEN, params)
    assert tag_scores.shape == (SENT_LEN, TAGSET_SIZE)
    assert jnp.allclose(tag_scores, ref, atol=1e-3, rtol=1e-3), (tag_scores, ref)

    # TODO(synk): char-LSTM runs all MAX_WORD_LEN=8 steps including padding chars
    # (matches this reference and the fixed-length PyTorch usage), not per-word true length.
    print("KERNEL_OK")
</pallas_src>

<mosaic_0001>
module attributes {stable_mosaic.version = 11 : i64} {
  func.func @lstm_tagger_kernel(%arg0: memref<72x8xf32, #tpu.memory_space<vmem>>, %arg1: memref<72x512xf32, #tpu.memory_space<vmem>>, %arg2: memref<8x128xf32, #tpu.memory_space<vmem>>) attributes {dimension_semantics = [], scalar_prefetch = 0 : i64, scratch_operands = 0 : i64, tpu.core_type = #tpu.core_type<tc>} {
    %c0 = arith.constant 0 : index
    %c0_0 = arith.constant 0 : index
    %0 = vector.load %arg1[%c0, %c0_0] : memref<72x512xf32, #tpu.memory_space<vmem>>, vector<3x512xf32>
    %c16 = arith.constant 16 : index
    %c0_1 = arith.constant 0 : index
    %1 = vector.load %arg1[%c16, %c0_1] : memref<72x512xf32, #tpu.memory_space<vmem>>, vector<1x512xf32>
    %c8 = arith.constant 8 : index
    %c0_2 = arith.constant 0 : index
    %2 = vector.load %arg1[%c8, %c0_2] : memref<72x512xf32, #tpu.memory_space<vmem>>, vector<1x512xf32>
    %3 = vector.shape_cast %2 : vector<1x512xf32> to vector<1x512xf32>
    %4 = vector.broadcast %3 : vector<1x512xf32> to vector<8x512xf32>
    %c9 = arith.constant 9 : index
    %c0_3 = arith.constant 0 : index
    %5 = vector.load %arg1[%c9, %c0_3] : memref<72x512xf32, #tpu.memory_space<vmem>>, vector<1x512xf32>
    %6 = vector.shape_cast %5 : vector<1x512xf32> to vector<1x512xf32>
    %7 = vector.broadcast %6 : vector<1x512xf32> to vector<8x512xf32>
    %c10 = arith.constant 10 : index
    %c0_4 = arith.constant 0 : index
    %8 = vector.load %arg1[%c10, %c0_4] : memref<72x512xf32, #tpu.memory_space<vmem>>, vector<1x512xf32>
    %9 = vector.shape_cast %8 : vector<1x512xf32> to vector<1x512xf32>
    %10 = vector.broadcast %9 : vector<1x512xf32> to vector<8x512xf32>
    %c24 = arith.constant 24 : index
    %c0_5 = arith.constant 0 : index
    %11 = vector.load %arg1[%c24, %c0_5] : memref<72x512xf32, #tpu.memory_space<vmem>>, vector<6x512xf32>
    %c32 = arith.constant 32 : index
    %c0_6 = arith.constant 0 : index
    %12 = vector.load %arg1[%c32, %c0_6] : memref<72x512xf32, #tpu.memory_space<vmem>>, vector<3x512xf32>
    %c48 = arith.constant 48 : index
    %c0_7 = arith.constant 0 : index
    %13 = vector.load %arg1[%c48, %c0_7] : memref<72x512xf32, #tpu.memory_space<vmem>>, vector<1x512xf32>
    %c40 = arith.constant 40 : index
    %c0_8 = arith.constant 0 : index
    %14 = vector.load %arg1[%c40, %c0_8] : memref<72x512xf32, #tpu.memory_space<vmem>>, vector<1x512xf32>
    %c41 = arith.constant 41 : index
    %c0_9 = arith.constant 0 : index
    %15 = vector.load %arg1[%c41, %c0_9] : memref<72x512xf32, #tpu.memory_space<vmem>>, vector<1x512xf32>
    %c42 = arith.constant 42 : index
    %c0_10 = arith.constant 0 : index
    %16 = vector.load %arg1[%c42, %c0_10] : memref<72x512xf32, #tpu.memory_space<vmem>>, vector<1x512xf32>
    %c43 = arith.constant 43 : index
    %c0_11 = arith.constant 0 : index
    %17 = vector.load %arg1[%c43, %c0_11] : memref<72x512xf32, #tpu.memory_space<vmem>>, vector<1x512xf32>
    %c44 = arith.constant 44 : index
    %c0_12 = arith.constant 0 : index
    %18 = vector.load %arg1[%c44, %c0_12] : memref<72x512xf32, #tpu.memory_space<vmem>>, vector<1x512xf32>
    %c45 = arith.constant 45 : index
    %c0_13 = arith.constant 0 : index
    %19 = vector.load %arg1[%c45, %c0_13] : memref<72x512xf32, #tpu.memory_space<vmem>>, vector<1x512xf32>
    %c56 = arith.constant 56 : index
    %c0_14 = arith.constant 0 : index
    %20 = vector.load %arg1[%c56, %c0_14] : memref<72x512xf32, #tpu.memory_space<vmem>>, vector<6x128xf32>
    %c64 = arith.constant 64 : index
    %c0_15 = arith.constant 0 : index
    %21 = vector.load %arg1[%c64, %c0_15] : memref<72x512xf32, #tpu.memory_space<vmem>>, vector<1x128xf32>
    %c0_16 = arith.constant 0 : index
    %c0_17 = arith.constant 0 : index
    %22 = vector.load %arg0[%c0_16, %c0_17] : memref<72x8xf32, #tpu.memory_space<vmem>>, vector<64x3xf32>
    %c64_18 = arith.constant 64 : index
    %c0_19 = arith.constant 0 : index
    %23 = vector.load %arg0[%c64_18, %c0_19] : memref<72x8xf32, #tpu.memory_space<vmem>>, vector<8x6xf32>
    %cst = arith.constant dense<0.000000e+00> : vector<64x512xf32>
    %24 = tpu.matmul %22, %0, %cst {dimension_numbers = #tpu.dot_dimension_numbers<[1], [0], [0], [1], [0, 0, 1, 1], [], []>} : vector<64x3xf32>, vector<3x512xf32>, vector<64x512xf32> -> vector<64x512xf32>
    %25 = vector.broadcast %1 : vector<1x512xf32> to vector<64x512xf32>
    %26 = arith.addf %24, %25 : vector<64x512xf32>
    %cst_20 = arith.constant 0.000000e+00 : f32
    %27 = vector.broadcast %cst_20 : f32 to vector<8x128xf32>
    %cst_21 = arith.constant 0.000000e+00 : f32
    %28 = vector.broadcast %cst_21 : f32 to vector<8x128xf32>
    %29 = vector.extract_strided_slice %27 {offsets = [0, 0], sizes = [8, 1], strides = [1, 1]} : vector<8x128xf32> to vector<8x1xf32>
    %30 = vector.shape_cast %29 : vector<8x1xf32> to vector<8x1xf32>
    %31 = vector.broadcast %30 : vector<8x1xf32> to vector<8x512xf32>
    %32 = arith.mulf %31, %4 : vector<8x512xf32>
    %33 = vector.extract_strided_slice %27 {offsets = [0, 1], sizes = [8, 1], strides = [1, 1]} : vector<8x128xf32> to vector<8x1xf32>
    %34 = vector.shape_cast %33 : vector<8x1xf32> to vector<8x1xf32>
    %35 = vector.broadcast %34 : vector<8x1xf32> to vector<8x512xf32>
    %36 = arith.mulf %35, %7 : vector<8x512xf32>
    %37 = arith.addf %32, %36 : vector<8x512xf32>
    %38 = vector.extract_strided_slice %27 {offsets = [0, 2], sizes = [8, 1], strides = [1, 1]} : vector<8x128xf32> to vector<8x1xf32>
    %39 = vector.shape_cast %38 : vector<8x1xf32> to vector<8x1xf32>
    %40 = vector.broadcast %39 : vector<8x1xf32> to vector<8x512xf32>
    %41 = arith.mulf %40, %10 : vector<8x512xf32>
    %42 = arith.addf %37, %41 : vector<8x512xf32>
    %43 = vector.extract_strided_slice %26 {offsets = [0, 0], sizes = [8, 512], strides = [1, 1]} : vector<64x512xf32> to vector<8x512xf32>
    %44 = arith.addf %43, %42 : vector<8x512xf32>
    %45 = vector.extract_strided_slice %44 {offsets = [0, 0], sizes = [8, 128], strides = [1, 1]} : vector<8x512xf32> to vector<8x128xf32>
    %46 = arith.negf %45 : vector<8x128xf32>
    %47 = math.exp %46 : vector<8x128xf32>
    %cst_22 = arith.constant 1.000000e+00 : f32
    %48 = vector.broadcast %cst_22 : f32 to vector<8x128xf32>
    %49 = arith.addf %48, %47 : vector<8x128xf32>
    %50 = arith.divf %48, %49 : vector<8x128xf32>
    %51 = vector.extract_strided_slice %44 {offsets = [0, 128], sizes = [8, 128], strides = [1, 1]} : vector<8x512xf32> to vector<8x128xf32>
    %52 = arith.negf %51 : vector<8x128xf32>
    %53 = math.exp %52 : vector<8x128xf32>
    %cst_23 = arith.constant 1.000000e+00 : f32
    %54 = vector.broadcast %cst_23 : f32 to vector<8x128xf32>
    %55 = arith.addf %54, %53 : vector<8x128xf32>
    %56 = arith.divf %54, %55 : vector<8x128xf32>
    %57 = vector.extract_strided_slice %44 {offsets = [0, 256], sizes = [8, 128], strides = [1, 1]} : vector<8x512xf32> to vector<8x128xf32>
    %58 = math.tanh %57 : vector<8x128xf32>
    %59 = vector.extract_strided_slice %44 {offsets = [0, 384], sizes = [8, 128], strides = [1, 1]} : vector<8x512xf32> to vector<8x128xf32>
    %60 = arith.negf %59 : vector<8x128xf32>
    %61 = math.exp %60 : vector<8x128xf32>
    %cst_24 = arith.constant 1.000000e+00 : f32
    %62 = vector.broadcast %cst_24 : f32 to vector<8x128xf32>
    %63 = arith.addf %62, %61 : vector<8x128xf32>
    %64 = arith.divf %62, %63 : vector<8x128xf32>
    %65 = arith.mulf %56, %28 : vector<8x128xf32>
    %66 = arith.mulf %50, %58 : vector<8x128xf32>
    %67 = arith.addf %65, %66 : vector<8x128xf32>
    %68 = math.tanh %67 : vector<8x128xf32>
    %69 = arith.mulf %64, %68 : vector<8x128xf32>
    %70 = vector.extract_strided_slice %69 {offsets = [0, 0], sizes = [8, 1], strides = [1, 1]} : vector<8x128xf32> to vector<8x1xf32>
    %71 = vector.shape_cast %70 : vector<8x1xf32> to vector<8x1xf32>
    %72 = vector.broadcast %71 : vector<8x1xf32> to vector<8x512xf32>
    %73 = arith.mulf %72, %4 : vector<8x512xf32>
    %74 = vector.extract_strided_slice %69 {offsets = [0, 1], sizes = [8, 1], strides = [1, 1]} : vector<8x128xf32> to vector<8x1xf32>
    %75 = vector.shape_cast %74 : vector<8x1xf32> to vector<8x1xf32>
    %76 = vector.broadcast %75 : vector<8x1xf32> to vector<8x512xf32>
    %77 = arith.mulf %76, %7 : vector<8x512xf32>
    %78 = arith.addf %73, %77 : vector<8x512xf32>
    %79 = vector.extract_strided_slice %69 {offsets = [0, 2], sizes = [8, 1], strides = [1, 1]} : vector<8x128xf32> to vector<8x1xf32>
    %80 = vector.shape_cast %79 : vector<8x1xf32> to vector<8x1xf32>
    %81 = vector.broadcast %80 : vector<8x1xf32> to vector<8x512xf32>
    %82 = arith.mulf %81, %10 : vector<8x512xf32>
    %83 = arith.addf %78, %82 : vector<8x512xf32>
    %84 = vector.extract_strided_slice %26 {offsets = [8, 0], sizes = [8, 512], strides = [1, 1]} : vector<64x512xf32> to vector<8x512xf32>
    %85 = arith.addf %84, %83 : vector<8x512xf32>
    %86 = vector.extract_strided_slice %85 {offsets = [0, 0], sizes = [8, 128], strides = [1, 1]} : vector<8x512xf32> to vector<8x128xf32>
    %87 = arith.negf %86 : vector<8x128xf32>
    %88 = math.exp %87 : vector<8x128xf32>
    %cst_25 = arith.constant 1.000000e+00 : f32
    %89 = vector.broadcast %cst_25 : f32 to vector<8x128xf32>
    %90 = arith.addf %89, %88 : vector<8x128xf32>
    %91 = arith.divf %89, %90 : vector<8x128xf32>
    %92 = vector.extract_strided_slice %85 {offsets = [0, 128], sizes = [8, 128], strides = [1, 1]} : vector<8x512xf32> to vector<8x128xf32>
    %93 = arith.negf %92 : vector<8x128xf32>
    %94 = math.exp %93 : vector<8x128xf32>
    %cst_26 = arith.constant 1.000000e+00 : f32
    %95 = vector.broadcast %cst_26 : f32 to vector<8x128xf32>
    %96 = arith.addf %95, %94 : vector<8x128xf32>
    %97 = arith.divf %95, %96 : vector<8x128xf32>
    %98 = vector.extract_strided_slice %85 {offsets = [0, 256], sizes = [8, 128], strides = [1, 1]} : vector<8x512xf32> to vector<8x128xf32>
    %99 = math.tanh %98 : vector<8x128xf32>
    %100 = vector.extract_strided_slice %85 {offsets = [0, 384], sizes = [8, 128], strides = [1, 1]} : vector<8x512xf32> to vector<8x128xf32>
    %101 = arith.negf %100 : vector<8x128xf32>
    %102 = math.exp %101 : vector<8x128xf32>
    %cst_27 = arith.constant 1.000000e+00 : f32
    %103 = vector.broadcast %cst_27 : f32 to vector<8x128xf32>
    %104 = arith.addf %103, %102 : vector<8x128xf32>
    %105 = arith.divf %103, %104 : vector<8x128xf32>
    %106 = arith.mulf %97, %67 : vector<8x128xf32>
    %107 = arith.mulf %91, %99 : vector<8x128xf32>
    %108 = arith.addf %106, %107 : vector<8x128xf32>
    %109 = math.tanh %108 : vector<8x128xf32>
    %110 = arith.mulf %105, %109 : vector<8x128xf32>
    %111 = vector.extract_strided_slice %110 {offsets = [0, 0], sizes = [8, 1], strides = [1, 1]} : vector<8x128xf32> to vector<8x1xf32>
    %112 = vector.shape_cast %111 : vector<8x1xf32> to vector<8x1xf32>
    %113 = vector.broadcast %112 : vector<8x1xf32> to vector<8x512xf32>
    %114 = arith.mulf %113, %4 : vector<8x512xf32>
    %115 = vector.extract_strided_slice %110 {offsets = [0, 1], sizes = [8, 1], strides = [1, 1]} : vector<8x128xf32> to vector<8x1xf32>
    %116 = vector.shape_cast %115 : vector<8x1xf32> to vector<8x1xf32>
    %117 = vector.broadcast %116 : vector<8x1xf32> to vector<8x512xf32>
    %118 = arith.mulf %117, %7 : vector<8x512xf32>
    %119 = arith.addf %114, %118 : vector<8x512xf32>
    %120 = vector.extract_strided_slice %110 {offsets = [0, 2], sizes = [8, 1], strides = [1, 1]} : vector<8x128xf32> to vector<8x1xf32>
    %121 = vector.shape_cast %120 : vector<8x1xf32> to vector<8x1xf32>
    %122 = vector.broadcast %121 : vector<8x1xf32> to vector<8x512xf32>
    %123 = arith.mulf %122, %10 : vector<8x512xf32>
    %124 = arith.addf %119, %123 : vector<8x512xf32>
    %125 = vector.extract_strided_slice %26 {offsets = [16, 0], sizes = [8, 512], strides = [1, 1]} : vector<64x512xf32> to vector<8x512xf32>
    %126 = arith.addf %125, %124 : vector<8x512xf32>
    %127 = vector.extract_strided_slice %126 {offsets = [0, 0], sizes = [8, 128], strides = [1, 1]} : vector<8x512xf32> to vector<8x128xf32>
    %128 = arith.negf %127 : vector<8x128xf32>
    %129 = math.exp %128 : vector<8x128xf32>
    %cst_28 = arith.constant 1.000000e+00 : f32
    %130 = vector.broadcast %cst_28 : f32 to vector<8x128xf32>
    %131 = arith.addf %130, %129 : vector<8x128xf32>
    %132 = arith.divf %130, %131 : vector<8x128xf32>
    %133 = vector.extract_strided_slice %126 {offsets = [0, 128], sizes = [8, 128], strides = [1, 1]} : vector<8x512xf32> to vector<8x128xf32>
    %134 = arith.negf %133 : vector<8x128xf32>
    %135 = math.exp %134 : vector<8x128xf32>
    %cst_29 = arith.constant 1.000000e+00 : f32
    %136 = vector.broadcast %cst_29 : f32 to vector<8x128xf32>
    %137 = arith.addf %136, %135 : vector<8x128xf32>
    %138 = arith.divf %136, %137 : vector<8x128xf32>
    %139 = vector.extract_strided_slice %126 {offsets = [0, 256], sizes = [8, 128], strides = [1, 1]} : vector<8x512xf32> to vector<8x128xf32>
    %140 = math.tanh %139 : vector<8x128xf32>
    %141 = vector.extract_strided_slice %126 {offsets = [0, 384], sizes = [8, 128], strides = [1, 1]} : vector<8x512xf32> to vector<8x128xf32>
    %142 = arith.negf %141 : vector<8x128xf32>
    %143 = math.exp %142 : vector<8x128xf32>
    %cst_30 = arith.constant 1.000000e+00 : f32
    %144 = vector.broadcast %cst_30 : f32 to vector<8x128xf32>
    %145 = arith.addf %144, %143 : vector<8x128xf32>
    %146 = arith.divf %144, %145 : vector<8x128xf32>
    %147 = arith.mulf %138, %108 : vector<8x128xf32>
    %148 = arith.mulf %132, %140 : vector<8x128xf32>
    %149 = arith.addf %147, %148 : vector<8x128xf32>
    %150 = math.tanh %149 : vector<8x128xf32>
    %151 = arith.mulf %146, %150 : vector<8x128xf32>
    %152 = vector.extract_strided_slice %151 {offsets = [0, 0], sizes = [8, 1], strides = [1, 1]} : vector<8x128xf32> to vector<8x1xf32>
    %153 = vector.shape_cast %152 : vector<8x1xf32> to vector<8x1xf32>
    %154 = vector.broadcast %153 : vector<8x1xf32> to vector<8x512xf32>
    %155 = arith.mulf %154, %4 : vector<8x512xf32>
    %156 = vector.extract_strided_slice %151 {offsets = [0, 1], sizes = [8, 1], strides = [1, 1]} : vector<8x128xf32> to vector<8x1xf32>
    %157 = vector.shape_cast %156 : vector<8x1xf32> to vector<8x1xf32>
    %158 = vector.broadcast %157 : vector<8x1xf32> to vector<8x512xf32>
    %159 = arith.mulf %158, %7 : vector<8x512xf32>
    %160 = arith.addf %155, %159 : vector<8x512xf32>
    %161 = vector.extract_strided_slice %151 {offsets = [0, 2], sizes = [8, 1], strides = [1, 1]} : vector<8x128xf32> to vector<8x1xf32>
    %162 = vector.shape_cast %161 : vector<8x1xf32> to vector<8x1xf32>
    %163 = vector.broadcast %162 : vector<8x1xf32> to vector<8x512xf32>
    %164 = arith.mulf %163, %10 : vector<8x512xf32>
    %165 = arith.addf %160, %164 : vector<8x512xf32>
    %166 = vector.extract_strided_slice %26 {offsets = [24, 0], sizes = [8, 512], strides = [1, 1]} : vector<64x512xf32> to vector<8x512xf32>
    %167 = arith.addf %166, %165 : vector<8x512xf32>
    %168 = vector.extract_strided_slice %167 {offsets = [0, 0], sizes = [8, 128], strides = [1, 1]} : vector<8x512xf32> to vector<8x128xf32>
    %169 = arith.negf %168 : vector<8x128xf32>
    %170 = math.exp %169 : vector<8x128xf32>
    %cst_31 = arith.constant 1.000000e+00 : f32
    %171 = vector.broadcast %cst_31 : f32 to vector<8x128xf32>
    %172 = arith.addf %171, %170 : vector<8x128xf32>
    %173 = arith.divf %171, %172 : vector<8x128xf32>
    %174 = vector.extract_strided_slice %167 {offsets = [0, 128], sizes = [8, 128], strides = [1, 1]} : vector<8x512xf32> to vector<8x128xf32>
    %175 = arith.negf %174 : vector<8x128xf32>
    %176 = math.exp %175 : vector<8x128xf32>
    %cst_32 = arith.constant 1.000000e+00 : f32
    %177 = vector.broadcast %cst_32 : f32 to vector<8x128xf32>
    %178 = arith.addf %177, %176 : vector<8x128xf32>
    %179 = arith.divf %177, %178 : vector<8x128xf32>
    %180 = vector.extract_strided_slice %167 {offsets = [0, 256], sizes = [8, 128], strides = [1, 1]} : vector<8x512xf32> to vector<8x128xf32>
    %181 = math.tanh %180 : vector<8x128xf32>
    %182 = vector.extract_strided_slice %167 {offsets = [0, 384], sizes = [8, 128], strides = [1, 1]} : vector<8x512xf32> to vector<8x128xf32>
    %183 = arith.negf %182 : vector<8x128xf32>
    %184 = math.exp %183 : vector<8x128xf32>
    %cst_33 = arith.constant 1.000000e+00 : f32
    %185 = vector.broadcast %cst_33 : f32 to vector<8x128xf32>
    %186 = arith.addf %185, %184 : vector<8x128xf32>
    %187 = arith.divf %185, %186 : vector<8x128xf32>
    %188 = arith.mulf %179, %149 : vector<8x128xf32>
    %189 = arith.mulf %173, %181 : vector<8x128xf32>
    %190 = arith.addf %188, %189 : vector<8x128xf32>
    %191 = math.tanh %190 : vector<8x128xf32>
    %192 = arith.mulf %187, %191 : vector<8x128xf32>
    %193 = vector.extract_strided_slice %192 {offsets = [0, 0], sizes = [8, 1], strides = [1, 1]} : vector<8x128xf32> to vector<8x1xf32>
    %194 = vector.shape_cast %193 : vector<8x1xf32> to vector<8x1xf32>
    %195 = vector.broadcast %194 : vector<8x1xf32> to vector<8x512xf32>
    %196 = arith.mulf %195, %4 : vector<8x512xf32>
    %197 = vector.extract_strided_slice %192 {offsets = [0, 1], sizes = [8, 1], strides = [1, 1]} : vector<8x128xf32> to vector<8x1xf32>
    %198 = vector.shape_cast %197 : vector<8x1xf32> to vector<8x1xf32>
    %199 = vector.broadcast %198 : vector<8x1xf32> to vector<8x512xf32>
    %200 = arith.mulf %199, %7 : vector<8x512xf32>
    %201 = arith.addf %196, %200 : vector<8x512xf32>
    %202 = vector.extract_strided_slice %192 {offsets = [0, 2], sizes = [8, 1], strides = [1, 1]} : vector<8x128xf32> to vector<8x1xf32>
    %203 = vector.shape_cast %202 : vector<8x1xf32> to vector<8x1xf32>
    %204 = vector.broadcast %203 : vector<8x1xf32> to vector<8x512xf32>
    %205 = arith.mulf %204, %10 : vector<8x512xf32>
    %206 = arith.addf %201, %205 : vector<8x512xf32>
    %207 = vector.extract_strided_slice %26 {offsets = [32, 0], sizes = [8, 512], strides = [1, 1]} : vector<64x512xf32> to vector<8x512xf32>
    %208 = arith.addf %207, %206 : vector<8x512xf32>
    %209 = vector.extract_strided_slice %208 {offsets = [0, 0], sizes = [8, 128], strides = [1, 1]} : vector<8x512xf32> to vector<8x128xf32>
    %210 = arith.negf %209 : vector<8x128xf32>
    %211 = math.exp %210 : vector<8x128xf32>
    %cst_34 = arith.constant 1.000000e+00 : f32
    %212 = vector.broadcast %cst_34 : f32 to vector<8x128xf32>
    %213 = arith.addf %212, %211 : vector<8x128xf32>
    %214 = arith.divf %212, %213 : vector<8x128xf32>
    %215 = vector.extract_strided_slice %208 {offsets = [0, 128], sizes = [8, 128], strides = [1, 1]} : vector<8x512xf32> to vector<8x128xf32>
    %216 = arith.negf %215 : vector<8x128xf32>
    %217 = math.exp %216 : vector<8x128xf32>
    %cst_35 = arith.constant 1.000000e+00 : f32
    %218 = vector.broadcast %cst_35 : f32 to vector<8x128xf32>
    %219 = arith.addf %218, %217 : vector<8x128xf32>
    %220 = arith.divf %218, %219 : vector<8x128xf32>
    %221 = vector.extract_strided_slice %208 {offsets = [0, 256], sizes = [8, 128], strides = [1, 1]} : vector<8x512xf32> to vector<8x128xf32>
    %222 = math.tanh %221 : vector<8x128xf32>
    %223 = vector.extract_strided_slice %208 {offsets = [0, 384], sizes = [8, 128], strides = [1, 1]} : vector<8x512xf32> to vector<8x128xf32>
    %224 = arith.negf %223 : vector<8x128xf32>
    %225 = math.exp %224 : vector<8x128xf32>
    %cst_36 = arith.constant 1.000000e+00 : f32
    %226 = vector.broadcast %cst_36 : f32 to vector<8x128xf32>
    %227 = arith.addf %226, %225 : vector<8x128xf32>
    %228 = arith.divf %226, %227 : vector<8x128xf32>
    %229 = arith.mulf %220, %190 : vector<8x128xf32>
    %230 = arith.mulf %214, %222 : vector<8x128xf32>
    %231 = arith.addf %229, %230 : vector<8x128xf32>
    %232 = math.tanh %231 : vector<8x128xf32>
    %233 = arith.mulf %228, %232 : vector<8x128xf32>
    %234 = vector.extract_strided_slice %233 {offsets = [0, 0], sizes = [8, 1], strides = [1, 1]} : vector<8x128xf32> to vector<8x1xf32>
    %235 = vector.shape_cast %234 : vector<8x1xf32> to vector<8x1xf32>
    %236 = vector.broadcast %235 : vector<8x1xf32> to vector<8x512xf32>
    %237 = arith.mulf %236, %4 : vector<8x512xf32>
    %238 = vector.extract_strided_slice %233 {offsets = [0, 1], sizes = [8, 1], strides = [1, 1]} : vector<8x128xf32> to vector<8x1xf32>
    %239 = vector.shape_cast %238 : vector<8x1xf32> to vector<8x1xf32>
    %240 = vector.broadcast %239 : vector<8x1xf32> to vector<8x512xf32>
    %241 = arith.mulf %240, %7 : vector<8x512xf32>
    %242 = arith.addf %237, %241 : vector<8x512xf32>
    %243 = vector.extract_strided_slice %233 {offsets = [0, 2], sizes = [8, 1], strides = [1, 1]} : vector<8x128xf32> to vector<8x1xf32>
    %244 = vector.shape_cast %243 : vector<8x1xf32> to vector<8x1xf32>
    %245 = vector.broadcast %244 : vector<8x1xf32> to vector<8x512xf32>
    %246 = arith.mulf %245, %10 : vector<8x512xf32>
    %247 = arith.addf %242, %246 : vector<8x512xf32>
    %248 = vector.extract_strided_slice %26 {offsets = [40, 0], sizes = [8, 512], strides = [1, 1]} : vector<64x512xf32> to vector<8x512xf32>
    %249 = arith.addf %248, %247 : vector<8x512xf32>
    %250 = vector.extract_strided_slice %249 {offsets = [0, 0], sizes = [8, 128], strides = [1, 1]} : vector<8x512xf32> to vector<8x128xf32>
    %251 = arith.negf %250 : vector<8x128xf32>
    %252 = math.exp %251 : vector<8x128xf32>
    %cst_37 = arith.constant 1.000000e+00 : f32
    %253 = vector.broadcast %cst_37 : f32 to vector<8x128xf32>
    %254 = arith.addf %253, %252 : vector<8x128xf32>
    %255 = arith.divf %253, %254 : vector<8x128xf32>
    %256 = vector.extract_strided_slice %249 {offsets = [0, 128], sizes = [8, 128], strides = [1, 1]} : vector<8x512xf32> to vector<8x128xf32>
    %257 = arith.negf %256 : vector<8x128xf32>
    %258 = math.exp %257 : vector<8x128xf32>
    %cst_38 = arith.constant 1.000000e+00 : f32
    %259 = vector.broadcast %cst_38 : f32 to vector<8x128xf32>
    %260 = arith.addf %259, %258 : vector<8x128xf32>
    %261 = arith.divf %259, %260 : vector<8x128xf32>
    %262 = vector.extract_strided_slice %249 {offsets = [0, 256], sizes = [8, 128], strides = [1, 1]} : vector<8x512xf32> to vector<8x128xf32>
    %263 = math.tanh %262 : vector<8x128xf32>
    %264 = vector.extract_strided_slice %249 {offsets = [0, 384], sizes = [8, 128], strides = [1, 1]} : vector<8x512xf32> to vector<8x128xf32>
    %265 = arith.negf %264 : vector<8x128xf32>
    %266 = math.exp %265 : vector<8x128xf32>
    %cst_39 = arith.constant 1.000000e+00 : f32
    %267 = vector.broadcast %cst_39 : f32 to vector<8x128xf32>
    %268 = arith.addf %267, %266 : vector<8x128xf32>
    %269 = arith.divf %267, %268 : vector<8x128xf32>
    %270 = arith.mulf %261, %231 : vector<8x128xf32>
    %271 = arith.mulf %255, %263 : vector<8x128xf32>
    %272 = arith.addf %270, %271 : vector<8x128xf32>
    %273 = math.tanh %272 : vector<8x128xf32>
    %274 = arith.mulf %269, %273 : vector<8x128xf32>
    %275 = vector.extract_strided_slice %274 {offsets = [0, 0], sizes = [8, 1], strides = [1, 1]} : vector<8x128xf32> to vector<8x1xf32>
    %276 = vector.shape_cast %275 : vector<8x1xf32> to vector<8x1xf32>
    %277 = vector.broadcast %276 : vector<8x1xf32> to vector<8x512xf32>
    %278 = arith.mulf %277, %4 : vector<8x512xf32>
    %279 = vector.extract_strided_slice %274 {offsets = [0, 1], sizes = [8, 1], strides = [1, 1]} : vector<8x128xf32> to vector<8x1xf32>
    %280 = vector.shape_cast %279 : vector<8x1xf32> to vector<8x1xf32>
    %281 = vector.broadcast %280 : vector<8x1xf32> to vector<8x512xf32>
    %282 = arith.mulf %281, %7 : vector<8x512xf32>
    %283 = arith.addf %278, %282 : vector<8x512xf32>
    %284 = vector.extract_strided_slice %274 {offsets = [0, 2], sizes = [8, 1], strides = [1, 1]} : vector<8x128xf32> to vector<8x1xf32>
    %285 = vector.shape_cast %284 : vector<8x1xf32> to vector<8x1xf32>
    %286 = vector.broadcast %285 : vector<8x1xf32> to vector<8x512xf32>
    %287 = arith.mulf %286, %10 : vector<8x512xf32>
    %288 = arith.addf %283, %287 : vector<8x512xf32>
    %289 = vector.extract_strided_slice %26 {offsets = [48, 0], sizes = [8, 512], strides = [1, 1]} : vector<64x512xf32> to vector<8x512xf32>
    %290 = arith.addf %289, %288 : vector<8x512xf32>
    %291 = vector.extract_strided_slice %290 {offsets = [0, 0], sizes = [8, 128], strides = [1, 1]} : vector<8x512xf32> to vector<8x128xf32>
    %292 = arith.negf %291 : vector<8x128xf32>
    %293 = math.exp %292 : vector<8x128xf32>
    %cst_40 = arith.constant 1.000000e+00 : f32
    %294 = vector.broadcast %cst_40 : f32 to vector<8x128xf32>
    %295 = arith.addf %294, %293 : vector<8x128xf32>
    %296 = arith.divf %294, %295 : vector<8x128xf32>
    %297 = vector.extract_strided_slice %290 {offsets = [0, 128], sizes = [8, 128], strides = [1, 1]} : vector<8x512xf32> to vector<8x128xf32>
    %298 = arith.negf %297 : vector<8x128xf32>
    %299 = math.exp %298 : vector<8x128xf32>
    %cst_41 = arith.constant 1.000000e+00 : f32
    %300 = vector.broadcast %cst_41 : f32 to vector<8x128xf32>
    %301 = arith.addf %300, %299 : vector<8x128xf32>
    %302 = arith.divf %300, %301 : vector<8x128xf32>
    %303 = vector.extract_strided_slice %290 {offsets = [0, 256], sizes = [8, 128], strides = [1, 1]} : vector<8x512xf32> to vector<8x128xf32>
    %304 = math.tanh %303 : vector<8x128xf32>
    %305 = vector.extract_strided_slice %290 {offsets = [0, 384], sizes = [8, 128], strides = [1, 1]} : vector<8x512xf32> to vector<8x128xf32>
    %306 = arith.negf %305 : vector<8x128xf32>
    %307 = math.exp %306 : vector<8x128xf32>
    %cst_42 = arith.constant 1.000000e+00 : f32
    %308 = vector.broadcast %cst_42 : f32 to vector<8x128xf32>
    %309 = arith.addf %308, %307 : vector<8x128xf32>
    %310 = arith.divf %308, %309 : vector<8x128xf32>
    %311 = arith.mulf %302, %272 : vector<8x128xf32>
    %312 = arith.mulf %296, %304 : vector<8x128xf32>
    %313 = arith.addf %311, %312 : vector<8x128xf32>
    %314 = math.tanh %313 : vector<8x128xf32>
    %315 = arith.mulf %310, %314 : vector<8x128xf32>
    %316 = vector.extract_strided_slice %315 {offsets = [0, 0], sizes = [8, 1], strides = [1, 1]} : vector<8x128xf32> to vector<8x1xf32>
    %317 = vector.shape_cast %316 : vector<8x1xf32> to vector<8x1xf32>
    %318 = vector.broadcast %317 : vector<8x1xf32> to vector<8x512xf32>
    %319 = arith.mulf %318, %4 : vector<8x512xf32>
    %320 = vector.extract_strided_slice %315 {offsets = [0, 1], sizes = [8, 1], strides = [1, 1]} : vector<8x128xf32> to vector<8x1xf32>
    %321 = vector.shape_cast %320 : vector<8x1xf32> to vector<8x1xf32>
    %322 = vector.broadcast %321 : vector<8x1xf32> to vector<8x512xf32>
    %323 = arith.mulf %322, %7 : vector<8x512xf32>
    %324 = arith.addf %319, %323 : vector<8x512xf32>
    %325 = vector.extract_strided_slice %315 {offsets = [0, 2], sizes = [8, 1], strides = [1, 1]} : vector<8x128xf32> to vector<8x1xf32>
    %326 = vector.shape_cast %325 : vector<8x1xf32> to vector<8x1xf32>
    %327 = vector.broadcast %326 : vector<8x1xf32> to vector<8x512xf32>
    %328 = arith.mulf %327, %10 : vector<8x512xf32>
    %329 = arith.addf %324, %328 : vector<8x512xf32>
    %330 = vector.extract_strided_slice %26 {offsets = [56, 0], sizes = [8, 512], strides = [1, 1]} : vector<64x512xf32> to vector<8x512xf32>
    %331 = arith.addf %330, %329 : vector<8x512xf32>
    %332 = vector.extract_strided_slice %331 {offsets = [0, 0], sizes = [8, 128], strides = [1, 1]} : vector<8x512xf32> to vector<8x128xf32>
    %333 = arith.negf %332 : vector<8x128xf32>
    %334 = math.exp %333 : vector<8x128xf32>
    %cst_43 = arith.constant 1.000000e+00 : f32
    %335 = vector.broadcast %cst_43 : f32 to vector<8x128xf32>
    %336 = arith.addf %335, %334 : vector<8x128xf32>
    %337 = arith.divf %335, %336 : vector<8x128xf32>
    %338 = vector.extract_strided_slice %331 {offsets = [0, 128], sizes = [8, 128], strides = [1, 1]} : vector<8x512xf32> to vector<8x128xf32>
    %339 = arith.negf %338 : vector<8x128xf32>
    %340 = math.exp %339 : vector<8x128xf32>
    %cst_44 = arith.constant 1.000000e+00 : f32
    %341 = vector.broadcast %cst_44 : f32 to vector<8x128xf32>
    %342 = arith.addf %341, %340 : vector<8x128xf32>
    %343 = arith.divf %341, %342 : vector<8x128xf32>
    %344 = vector.extract_strided_slice %331 {offsets = [0, 256], sizes = [8, 128], strides = [1, 1]} : vector<8x512xf32> to vector<8x128xf32>
    %345 = math.tanh %344 : vector<8x128xf32>
    %346 = vector.extract_strided_slice %331 {offsets = [0, 384], sizes = [8, 128], strides = [1, 1]} : vector<8x512xf32> to vector<8x128xf32>
    %347 = arith.negf %346 : vector<8x128xf32>
    %348 = math.exp %347 : vector<8x128xf32>
    %cst_45 = arith.constant 1.000000e+00 : f32
    %349 = vector.broadcast %cst_45 : f32 to vector<8x128xf32>
    %350 = arith.addf %349, %348 : vector<8x128xf32>
    %351 = arith.divf %349, %350 : vector<8x128xf32>
    %352 = arith.mulf %343, %313 : vector<8x128xf32>
    %353 = arith.mulf %337, %345 : vector<8x128xf32>
    %354 = arith.addf %352, %353 : vector<8x128xf32>
    %355 = math.tanh %354 : vector<8x128xf32>
    %356 = arith.mulf %351, %355 : vector<8x128xf32>
    %cst_46 = arith.constant dense<0.000000e+00> : vector<8x512xf32>
    %357 = tpu.matmul %23, %11, %cst_46 {dimension_numbers = #tpu.dot_dimension_numbers<[1], [0], [0], [1], [0, 0, 1, 1], [], []>} : vector<8x6xf32>, vector<6x512xf32>, vector<8x512xf32> -> vector<8x512xf32>
    %358 = vector.extract_strided_slice %356 {offsets = [0, 0], sizes = [8, 3], strides = [1, 1]} : vector<8x128xf32> to vector<8x3xf32>
    %cst_47 = arith.constant dense<0.000000e+00> : vector<8x512xf32>
    %359 = tpu.matmul %358, %12, %cst_47 {dimension_numbers = #tpu.dot_dimension_numbers<[1], [0], [0], [1], [0, 0, 1, 1], [], []>} : vector<8x3xf32>, vector<3x512xf32>, vector<8x512xf32> -> vector<8x512xf32>
    %360 = arith.addf %357, %359 : vector<8x512xf32>
    %361 = vector.broadcast %13 : vector<1x512xf32> to vector<8x512xf32>
    %362 = arith.addf %360, %361 : vector<8x512xf32>
    %cst_48 = arith.constant 0.000000e+00 : f32
    %363 = vector.broadcast %cst_48 : f32 to vector<1x128xf32>
    %cst_49 = arith.constant 0.000000e+00 : f32
    %364 = vector.broadcast %cst_49 : f32 to vector<1x128xf32>
    %365 = vector.extract_strided_slice %363 {offsets = [0, 0], sizes = [1, 1], strides = [1, 1]} : vector<1x128xf32> to vector<1x1xf32>
    %366 = vector.shape_cast %365 : vector<1x1xf32> to vector<1x1xf32>
    %367 = vector.broadcast %366 : vector<1x1xf32> to vector<1x512xf32>
    %368 = arith.mulf %367, %14 : vector<1x512xf32>
    %369 = vector.extract_strided_slice %363 {offsets = [0, 1], sizes = [1, 1], strides = [1, 1]} : vector<1x128xf32> to vector<1x1xf32>
    %370 = vector.shape_cast %369 : vector<1x1xf32> to vector<1x1xf32>
    %371 = vector.broadcast %370 : vector<1x1xf32> to vector<1x512xf32>
    %372 = arith.mulf %371, %15 : vector<1x512xf32>
    %373 = arith.addf %368, %372 : vector<1x512xf32>
    %374 = vector.extract_strided_slice %363 {offsets = [0, 2], sizes = [1, 1], strides = [1, 1]} : vector<1x128xf32> to vector<1x1xf32>
    %375 = vector.shape_cast %374 : vector<1x1xf32> to vector<1x1xf32>
    %376 = vector.broadcast %375 : vector<1x1xf32> to vector<1x512xf32>
    %377 = arith.mulf %376, %16 : vector<1x512xf32>
    %378 = arith.addf %373, %377 : vector<1x512xf32>
    %379 = vector.extract_strided_slice %363 {offsets = [0, 3], sizes = [1, 1], strides = [1, 1]} : vector<1x128xf32> to vector<1x1xf32>
    %380 = vector.shape_cast %379 : vector<1x1xf32> to vector<1x1xf32>
    %381 = vector.broadcast %380 : vector<1x1xf32> to vector<1x512xf32>
    %382 = arith.mulf %381, %17 : vector<1x512xf32>
    %383 = arith.addf %378, %382 : vector<1x512xf32>
    %384 = vector.extract_strided_slice %363 {offsets = [0, 4], sizes = [1, 1], strides = [1, 1]} : vector<1x128xf32> to vector<1x1xf32>
    %385 = vector.shape_cast %384 : vector<1x1xf32> to vector<1x1xf32>
    %386 = vector.broadcast %385 : vector<1x1xf32> to vector<1x512xf32>
    %387 = arith.mulf %386, %18 : vector<1x512xf32>
    %388 = arith.addf %383, %387 : vector<1x512xf32>
    %389 = vector.extract_strided_slice %363 {offsets = [0, 5], sizes = [1, 1], strides = [1, 1]} : vector<1x128xf32> to vector<1x1xf32>
    %390 = vector.shape_cast %389 : vector<1x1xf32> to vector<1x1xf32>
    %391 = vector.broadcast %390 : vector<1x1xf32> to vector<1x512xf32>
    %392 = arith.mulf %391, %19 : vector<1x512xf32>
    %393 = arith.addf %388, %392 : vector<1x512xf32>
    %394 = vector.extract_strided_slice %362 {offsets = [0, 0], sizes = [1, 512], strides = [1, 1]} : vector<8x512xf32> to vector<1x512xf32>
    %395 = arith.addf %394, %393 : vector<1x512xf32>
    %396 = vector.extract_strided_slice %395 {offsets = [0, 0], sizes = [1, 128], strides = [1, 1]} : vector<1x512xf32> to vector<1x128xf32>
    %397 = arith.negf %396 : vector<1x128xf32>
    %398 = math.exp %397 : vector<1x128xf32>
    %cst_50 = arith.constant 1.000000e+00 : f32
    %399 = vector.broadcast %cst_50 : f32 to vector<1x128xf32>
    %400 = arith.addf %399, %398 : vector<1x128xf32>
    %401 = arith.divf %399, %400 : vector<1x128xf32>
    %402 = vector.extract_strided_slice %395 {offsets = [0, 128], sizes = [1, 128], strides = [1, 1]} : vector<1x512xf32> to vector<1x128xf32>
    %403 = arith.negf %402 : vector<1x128xf32>
    %404 = math.exp %403 : vector<1x128xf32>
    %cst_51 = arith.constant 1.000000e+00 : f32
    %405 = vector.broadcast %cst_51 : f32 to vector<1x128xf32>
    %406 = arith.addf %405, %404 : vector<1x128xf32>
    %407 = arith.divf %405, %406 : vector<1x128xf32>
    %408 = vector.extract_strided_slice %395 {offsets = [0, 256], sizes = [1, 128], strides = [1, 1]} : vector<1x512xf32> to vector<1x128xf32>
    %409 = math.tanh %408 : vector<1x128xf32>
    %410 = vector.extract_strided_slice %395 {offsets = [0, 384], sizes = [1, 128], strides = [1, 1]} : vector<1x512xf32> to vector<1x128xf32>
    %411 = arith.negf %410 : vector<1x128xf32>
    %412 = math.exp %411 : vector<1x128xf32>
    %cst_52 = arith.constant 1.000000e+00 : f32
    %413 = vector.broadcast %cst_52 : f32 to vector<1x128xf32>
    %414 = arith.addf %413, %412 : vector<1x128xf32>
    %415 = arith.divf %413, %414 : vector<1x128xf32>
    %416 = arith.mulf %407, %364 : vector<1x128xf32>
    %417 = arith.mulf %401, %409 : vector<1x128xf32>
    %418 = arith.addf %416, %417 : vector<1x128xf32>
    %419 = math.tanh %418 : vector<1x128xf32>
    %420 = arith.mulf %415, %419 : vector<1x128xf32>
    %421 = vector.extract_strided_slice %420 {offsets = [0, 0], sizes = [1, 1], strides = [1, 1]} : vector<1x128xf32> to vector<1x1xf32>
    %422 = vector.shape_cast %421 : vector<1x1xf32> to vector<1x1xf32>
    %423 = vector.broadcast %422 : vector<1x1xf32> to vector<1x512xf32>
    %424 = arith.mulf %423, %14 : vector<1x512xf32>
    %425 = vector.extract_strided_slice %420 {offsets = [0, 1], sizes = [1, 1], strides = [1, 1]} : vector<1x128xf32> to vector<1x1xf32>
    %426 = vector.shape_cast %425 : vector<1x1xf32> to vector<1x1xf32>
    %427 = vector.broadcast %426 : vector<1x1xf32> to vector<1x512xf32>
    %428 = arith.mulf %427, %15 : vector<1x512xf32>
    %429 = arith.addf %424, %428 : vector<1x512xf32>
    %430 = vector.extract_strided_slice %420 {offsets = [0, 2], sizes = [1, 1], strides = [1, 1]} : vector<1x128xf32> to vector<1x1xf32>
    %431 = vector.shape_cast %430 : vector<1x1xf32> to vector<1x1xf32>
    %432 = vector.broadcast %431 : vector<1x1xf32> to vector<1x512xf32>
    %433 = arith.mulf %432, %16 : vector<1x512xf32>
    %434 = arith.addf %429, %433 : vector<1x512xf32>
    %435 = vector.extract_strided_slice %420 {offsets = [0, 3], sizes = [1, 1], strides = [1, 1]} : vector<1x128xf32> to vector<1x1xf32>
    %436 = vector.shape_cast %435 : vector<1x1xf32> to vector<1x1xf32>
    %437 = vector.broadcast %436 : vector<1x1xf32> to vector<1x512xf32>
    %438 = arith.mulf %437, %17 : vector<1x512xf32>
    %439 = arith.addf %434, %438 : vector<1x512xf32>
    %440 = vector.extract_strided_slice %420 {offsets = [0, 4], sizes = [1, 1], strides = [1, 1]} : vector<1x128xf32> to vector<1x1xf32>
    %441 = vector.shape_cast %440 : vector<1x1xf32> to vector<1x1xf32>
    %442 = vector.broadcast %441 : vector<1x1xf32> to vector<1x512xf32>
    %443 = arith.mulf %442, %18 : vector<1x512xf32>
    %444 = arith.addf %439, %443 : vector<1x512xf32>
    %445 = vector.extract_strided_slice %420 {offsets = [0, 5], sizes = [1, 1], strides = [1, 1]} : vector<1x128xf32> to vector<1x1xf32>
    %446 = vector.shape_cast %445 : vector<1x1xf32> to vector<1x1xf32>
    %447 = vector.broadcast %446 : vector<1x1xf32> to vector<1x512xf32>
    %448 = arith.mulf %447, %19 : vector<1x512xf32>
    %449 = arith.addf %444, %448 : vector<1x512xf32>
    %450 = vector.extract_strided_slice %362 {offsets = [1, 0], sizes = [1, 512], strides = [1, 1]} : vector<8x512xf32> to vector<1x512xf32>
    %451 = arith.addf %450, %449 : vector<1x512xf32>
    %452 = vector.extract_strided_slice %451 {offsets = [0, 0], sizes = [1, 128], strides = [1, 1]} : vector<1x512xf32> to vector<1x128xf32>
    %453 = arith.negf %452 : vector<1x128xf32>
    %454 = math.exp %453 : vector<1x128xf32>
    %cst_53 = arith.constant 1.000000e+00 : f32
    %455 = vector.broadcast %cst_53 : f32 to vector<1x128xf32>
    %456 = arith.addf %455, %454 : vector<1x128xf32>
    %457 = arith.divf %455, %456 : vector<1x128xf32>
    %458 = vector.extract_strided_slice %451 {offsets = [0, 128], sizes = [1, 128], strides = [1, 1]} : vector<1x512xf32> to vector<1x128xf32>
    %459 = arith.negf %458 : vector<1x128xf32>
    %460 = math.exp %459 : vector<1x128xf32>
    %cst_54 = arith.constant 1.000000e+00 : f32
    %461 = vector.broadcast %cst_54 : f32 to vector<1x128xf32>
    %462 = arith.addf %461, %460 : vector<1x128xf32>
    %463 = arith.divf %461, %462 : vector<1x128xf32>
    %464 = vector.extract_strided_slice %451 {offsets = [0, 256], sizes = [1, 128], strides = [1, 1]} : vector<1x512xf32> to vector<1x128xf32>
    %465 = math.tanh %464 : vector<1x128xf32>
    %466 = vector.extract_strided_slice %451 {offsets = [0, 384], sizes = [1, 128], strides = [1, 1]} : vector<1x512xf32> to vector<1x128xf32>
    %467 = arith.negf %466 : vector<1x128xf32>
    %468 = math.exp %467 : vector<1x128xf32>
    %cst_55 = arith.constant 1.000000e+00 : f32
    %469 = vector.broadcast %cst_55 : f32 to vector<1x128xf32>
    %470 = arith.addf %469, %468 : vector<1x128xf32>
    %471 = arith.divf %469, %470 : vector<1x128xf32>
    %472 = arith.mulf %463, %418 : vector<1x128xf32>
    %473 = arith.mulf %457, %465 : vector<1x128xf32>
    %474 = arith.addf %472, %473 : vector<1x128xf32>
    %475 = math.tanh %474 : vector<1x128xf32>
    %476 = arith.mulf %471, %475 : vector<1x128xf32>
    %477 = vector.extract_strided_slice %476 {offsets = [0, 0], sizes = [1, 1], strides = [1, 1]} : vector<1x128xf32> to vector<1x1xf32>
    %478 = vector.shape_cast %477 : vector<1x1xf32> to vector<1x1xf32>
    %479 = vector.broadcast %478 : vector<1x1xf32> to vector<1x512xf32>
    %480 = arith.mulf %479, %14 : vector<1x512xf32>
    %481 = vector.extract_strided_slice %476 {offsets = [0, 1], sizes = [1, 1], strides = [1, 1]} : vector<1x128xf32> to vector<1x1xf32>
    %482 = vector.shape_cast %481 : vector<1x1xf32> to vector<1x1xf32>
    %483 = vector.broadcast %482 : vector<1x1xf32> to vector<1x512xf32>
    %484 = arith.mulf %483, %15 : vector<1x512xf32>
    %485 = arith.addf %480, %484 : vector<1x512xf32>
    %486 = vector.extract_strided_slice %476 {offsets = [0, 2], sizes = [1, 1], strides = [1, 1]} : vector<1x128xf32> to vector<1x1xf32>
    %487 = vector.shape_cast %486 : vector<1x1xf32> to vector<1x1xf32>
    %488 = vector.broadcast %487 : vector<1x1xf32> to vector<1x512xf32>
    %489 = arith.mulf %488, %16 : vector<1x512xf32>
    %490 = arith.addf %485, %489 : vector<1x512xf32>
    %491 = vector.extract_strided_slice %476 {offsets = [0, 3], sizes = [1, 1], strides = [1, 1]} : vector<1x128xf32> to vector<1x1xf32>
    %492 = vector.shape_cast %491 : vector<1x1xf32> to vector<1x1xf32>
    %493 = vector.broadcast %492 : vector<1x1xf32> to vector<1x512xf32>
    %494 = arith.mulf %493, %17 : vector<1x512xf32>
    %495 = arith.addf %490, %494 : vector<1x512xf32>
    %496 = vector.extract_strided_slice %476 {offsets = [0, 4], sizes = [1, 1], strides = [1, 1]} : vector<1x128xf32> to vector<1x1xf32>
    %497 = vector.shape_cast %496 : vector<1x1xf32> to vector<1x1xf32>
    %498 = vector.broadcast %497 : vector<1x1xf32> to vector<1x512xf32>
    %499 = arith.mulf %498, %18 : vector<1x512xf32>
    %500 = arith.addf %495, %499 : vector<1x512xf32>
    %501 = vector.extract_strided_slice %476 {offsets = [0, 5], sizes = [1, 1], strides = [1, 1]} : vector<1x128xf32> to vector<1x1xf32>
    %502 = vector.shape_cast %501 : vector<1x1xf32> to vector<1x1xf32>
    %503 = vector.broadcast %502 : vector<1x1xf32> to vector<1x512xf32>
    %504 = arith.mulf %503, %19 : vector<1x512xf32>
    %505 = arith.addf %500, %504 : vector<1x512xf32>
    %506 = vector.extract_strided_slice %362 {offsets = [2, 0], sizes = [1, 512], strides = [1, 1]} : vector<8x512xf32> to vector<1x512xf32>
    %507 = arith.addf %506, %505 : vector<1x512xf32>
    %508 = vector.extract_strided_slice %507 {offsets = [0, 0], sizes = [1, 128], strides = [1, 1]} : vector<1x512xf32> to vector<1x128xf32>
    %509 = arith.negf %508 : vector<1x128xf32>
    %510 = math.exp %509 : vector<1x128xf32>
    %cst_56 = arith.constant 1.000000e+00 : f32
    %511 = vector.broadcast %cst_56 : f32 to vector<1x128xf32>
    %512 = arith.addf %511, %510 : vector<1x128xf32>
    %513 = arith.divf %511, %512 : vector<1x128xf32>
    %514 = vector.extract_strided_slice %507 {offsets = [0, 128], sizes = [1, 128], strides = [1, 1]} : vector<1x512xf32> to vector<1x128xf32>
    %515 = arith.negf %514 : vector<1x128xf32>
    %516 = math.exp %515 : vector<1x128xf32>
    %cst_57 = arith.constant 1.000000e+00 : f32
    %517 = vector.broadcast %cst_57 : f32 to vector<1x128xf32>
    %518 = arith.addf %517, %516 : vector<1x128xf32>
    %519 = arith.divf %517, %518 : vector<1x128xf32>
    %520 = vector.extract_strided_slice %507 {offsets = [0, 256], sizes = [1, 128], strides = [1, 1]} : vector<1x512xf32> to vector<1x128xf32>
    %521 = math.tanh %520 : vector<1x128xf32>
    %522 = vector.extract_strided_slice %507 {offsets = [0, 384], sizes = [1, 128], strides = [1, 1]} : vector<1x512xf32> to vector<1x128xf32>
    %523 = arith.negf %522 : vector<1x128xf32>
    %524 = math.exp %523 : vector<1x128xf32>
    %cst_58 = arith.constant 1.000000e+00 : f32
    %525 = vector.broadcast %cst_58 : f32 to vector<1x128xf32>
    %526 = arith.addf %525, %524 : vector<1x128xf32>
    %527 = arith.divf %525, %526 : vector<1x128xf32>
    %528 = arith.mulf %519, %474 : vector<1x128xf32>
    %529 = arith.mulf %513, %521 : vector<1x128xf32>
    %530 = arith.addf %528, %529 : vector<1x128xf32>
    %531 = math.tanh %530 : vector<1x128xf32>
    %532 = arith.mulf %527, %531 : vector<1x128xf32>
    %533 = vector.extract_strided_slice %532 {offsets = [0, 0], sizes = [1, 1], strides = [1, 1]} : vector<1x128xf32> to vector<1x1xf32>
    %534 = vector.shape_cast %533 : vector<1x1xf32> to vector<1x1xf32>
    %535 = vector.broadcast %534 : vector<1x1xf32> to vector<1x512xf32>
    %536 = arith.mulf %535, %14 : vector<1x512xf32>
    %537 = vector.extract_strided_slice %532 {offsets = [0, 1], sizes = [1, 1], strides = [1, 1]} : vector<1x128xf32> to vector<1x1xf32>
    %538 = vector.shape_cast %537 : vector<1x1xf32> to vector<1x1xf32>
    %539 = vector.broadcast %538 : vector<1x1xf32> to vector<1x512xf32>
    %540 = arith.mulf %539, %15 : vector<1x512xf32>
    %541 = arith.addf %536, %540 : vector<1x512xf32>
    %542 = vector.extract_strided_slice %532 {offsets = [0, 2], sizes = [1, 1], strides = [1, 1]} : vector<1x128xf32> to vector<1x1xf32>
    %543 = vector.shape_cast %542 : vector<1x1xf32> to vector<1x1xf32>
    %544 = vector.broadcast %543 : vector<1x1xf32> to vector<1x512xf32>
    %545 = arith.mulf %544, %16 : vector<1x512xf32>
    %546 = arith.addf %541, %545 : vector<1x512xf32>
    %547 = vector.extract_strided_slice %532 {offsets = [0, 3], sizes = [1, 1], strides = [1, 1]} : vector<1x128xf32> to vector<1x1xf32>
    %548 = vector.shape_cast %547 : vector<1x1xf32> to vector<1x1xf32>
    %549 = vector.broadcast %548 : vector<1x1xf32> to vector<1x512xf32>
    %550 = arith.mulf %549, %17 : vector<1x512xf32>
    %551 = arith.addf %546, %550 : vector<1x512xf32>
    %552 = vector.extract_strided_slice %532 {offsets = [0, 4], sizes = [1, 1], strides = [1, 1]} : vector<1x128xf32> to vector<1x1xf32>
    %553 = vector.shape_cast %552 : vector<1x1xf32> to vector<1x1xf32>
    %554 = vector.broadcast %553 : vector<1x1xf32> to vector<1x512xf32>
    %555 = arith.mulf %554, %18 : vector<1x512xf32>
    %556 = arith.addf %551, %555 : vector<1x512xf32>
    %557 = vector.extract_strided_slice %532 {offsets = [0, 5], sizes = [1, 1], strides = [1, 1]} : vector<1x128xf32> to vector<1x1xf32>
    %558 = vector.shape_cast %557 : vector<1x1xf32> to vector<1x1xf32>
    %559 = vector.broadcast %558 : vector<1x1xf32> to vector<1x512xf32>
    %560 = arith.mulf %559, %19 : vector<1x512xf32>
    %561 = arith.addf %556, %560 : vector<1x512xf32>
    %562 = vector.extract_strided_slice %362 {offsets = [3, 0], sizes = [1, 512], strides = [1, 1]} : vector<8x512xf32> to vector<1x512xf32>
    %563 = arith.addf %562, %561 : vector<1x512xf32>
    %564 = vector.extract_strided_slice %563 {offsets = [0, 0], sizes = [1, 128], strides = [1, 1]} : vector<1x512xf32> to vector<1x128xf32>
    %565 = arith.negf %564 : vector<1x128xf32>
    %566 = math.exp %565 : vector<1x128xf32>
    %cst_59 = arith.constant 1.000000e+00 : f32
    %567 = vector.broadcast %cst_59 : f32 to vector<1x128xf32>
    %568 = arith.addf %567, %566 : vector<1x128xf32>
    %569 = arith.divf %567, %568 : vector<1x128xf32>
    %570 = vector.extract_strided_slice %563 {offsets = [0, 128], sizes = [1, 128], strides = [1, 1]} : vector<1x512xf32> to vector<1x128xf32>
    %571 = arith.negf %570 : vector<1x128xf32>
    %572 = math.exp %571 : vector<1x128xf32>
    %cst_60 = arith.constant 1.000000e+00 : f32
    %573 = vector.broadcast %cst_60 : f32 to vector<1x128xf32>
    %574 = arith.addf %573, %572 : vector<1x128xf32>
    %575 = arith.divf %573, %574 : vector<1x128xf32>
    %576 = vector.extract_strided_slice %563 {offsets = [0, 256], sizes = [1, 128], strides = [1, 1]} : vector<1x512xf32> to vector<1x128xf32>
    %577 = math.tanh %576 : vector<1x128xf32>
    %578 = vector.extract_strided_slice %563 {offsets = [0, 384], sizes = [1, 128], strides = [1, 1]} : vector<1x512xf32> to vector<1x128xf32>
    %579 = arith.negf %578 : vector<1x128xf32>
    %580 = math.exp %579 : vector<1x128xf32>
    %cst_61 = arith.constant 1.000000e+00 : f32
    %581 = vector.broadcast %cst_61 : f32 to vector<1x128xf32>
    %582 = arith.addf %581, %580 : vector<1x128xf32>
    %583 = arith.divf %581, %582 : vector<1x128xf32>
    %584 = arith.mulf %575, %530 : vector<1x128xf32>
    %585 = arith.mulf %569, %577 : vector<1x128xf32>
    %586 = arith.addf %584, %585 : vector<1x128xf32>
    %587 = math.tanh %586 : vector<1x128xf32>
    %588 = arith.mulf %583, %587 : vector<1x128xf32>
    %589 = vector.extract_strided_slice %588 {offsets = [0, 0], sizes = [1, 1], strides = [1, 1]} : vector<1x128xf32> to vector<1x1xf32>
    %590 = vector.shape_cast %589 : vector<1x1xf32> to vector<1x1xf32>
    %591 = vector.broadcast %590 : vector<1x1xf32> to vector<1x512xf32>
    %592 = arith.mulf %591, %14 : vector<1x512xf32>
    %593 = vector.extract_strided_slice %588 {offsets = [0, 1], sizes = [1, 1], strides = [1, 1]} : vector<1x128xf32> to vector<1x1xf32>
    %594 = vector.shape_cast %593 : vector<1x1xf32> to vector<1x1xf32>
    %595 = vector.broadcast %594 : vector<1x1xf32> to vector<1x512xf32>
    %596 = arith.mulf %595, %15 : vector<1x512xf32>
    %597 = arith.addf %592, %596 : vector<1x512xf32>
    %598 = vector.extract_strided_slice %588 {offsets = [0, 2], sizes = [1, 1], strides = [1, 1]} : vector<1x128xf32> to vector<1x1xf32>
    %599 = vector.shape_cast %598 : vector<1x1xf32> to vector<1x1xf32>
    %600 = vector.broadcast %599 : vector<1x1xf32> to vector<1x512xf32>
    %601 = arith.mulf %600, %16 : vector<1x512xf32>
    %602 = arith.addf %597, %601 : vector<1x512xf32>
    %603 = vector.extract_strided_slice %588 {offsets = [0, 3], sizes = [1, 1], strides = [1, 1]} : vector<1x128xf32> to vector<1x1xf32>
    %604 = vector.shape_cast %603 : vector<1x1xf32> to vector<1x1xf32>
    %605 = vector.broadcast %604 : vector<1x1xf32> to vector<1x512xf32>
    %606 = arith.mulf %605, %17 : vector<1x512xf32>
    %607 = arith.addf %602, %606 : vector<1x512xf32>
    %608 = vector.extract_strided_slice %588 {offsets = [0, 4], sizes = [1, 1], strides = [1, 1]} : vector<1x128xf32> to vector<1x1xf32>
    %609 = vector.shape_cast %608 : vector<1x1xf32> to vector<1x1xf32>
    %610 = vector.broadcast %609 : vector<1x1xf32> to vector<1x512xf32>
    %611 = arith.mulf %610, %18 : vector<1x512xf32>
    %612 = arith.addf %607, %611 : vector<1x512xf32>
    %613 = vector.extract_strided_slice %588 {offsets = [0, 5], sizes = [1, 1], strides = [1, 1]} : vector<1x128xf32> to vector<1x1xf32>
    %614 = vector.shape_cast %613 : vector<1x1xf32> to vector<1x1xf32>
    %615 = vector.broadcast %614 : vector<1x1xf32> to vector<1x512xf32>
    %616 = arith.mulf %615, %19 : vector<1x512xf32>
    %617 = arith.addf %612, %616 : vector<1x512xf32>
    %618 = vector.extract_strided_slice %362 {offsets = [4, 0], sizes = [1, 512], strides = [1, 1]} : vector<8x512xf32> to vector<1x512xf32>
    %619 = arith.addf %618, %617 : vector<1x512xf32>
    %620 = vector.extract_strided_slice %619 {offsets = [0, 0], sizes = [1, 128], strides = [1, 1]} : vector<1x512xf32> to vector<1x128xf32>
    %621 = arith.negf %620 : vector<1x128xf32>
    %622 = math.exp %621 : vector<1x128xf32>
    %cst_62 = arith.constant 1.000000e+00 : f32
    %623 = vector.broadcast %cst_62 : f32 to vector<1x128xf32>
    %624 = arith.addf %623, %622 : vector<1x128xf32>
    %625 = arith.divf %623, %624 : vector<1x128xf32>
    %626 = vector.extract_strided_slice %619 {offsets = [0, 128], sizes = [1, 128], strides = [1, 1]} : vector<1x512xf32> to vector<1x128xf32>
    %627 = arith.negf %626 : vector<1x128xf32>
    %628 = math.exp %627 : vector<1x128xf32>
    %cst_63 = arith.constant 1.000000e+00 : f32
    %629 = vector.broadcast %cst_63 : f32 to vector<1x128xf32>
    %630 = arith.addf %629, %628 : vector<1x128xf32>
    %631 = arith.divf %629, %630 : vector<1x128xf32>
    %632 = vector.extract_strided_slice %619 {offsets = [0, 256], sizes = [1, 128], strides = [1, 1]} : vector<1x512xf32> to vector<1x128xf32>
    %633 = math.tanh %632 : vector<1x128xf32>
    %634 = vector.extract_strided_slice %619 {offsets = [0, 384], sizes = [1, 128], strides = [1, 1]} : vector<1x512xf32> to vector<1x128xf32>
    %635 = arith.negf %634 : vector<1x128xf32>
    %636 = math.exp %635 : vector<1x128xf32>
    %cst_64 = arith.constant 1.000000e+00 : f32
    %637 = vector.broadcast %cst_64 : f32 to vector<1x128xf32>
    %638 = arith.addf %637, %636 : vector<1x128xf32>
    %639 = arith.divf %637, %638 : vector<1x128xf32>
    %640 = arith.mulf %631, %586 : vector<1x128xf32>
    %641 = arith.mulf %625, %633 : vector<1x128xf32>
    %642 = arith.addf %640, %641 : vector<1x128xf32>
    %643 = math.tanh %642 : vector<1x128xf32>
    %644 = arith.mulf %639, %643 : vector<1x128xf32>
    %cst_65 = arith.constant 0.000000e+00 : f32
    %645 = vector.broadcast %cst_65 : f32 to vector<3x128xf32>
    %646 = tpu.concatenate %420, %476, %532, %588, %644, %645 in 0 : vector<1x128xf32>, vector<1x128xf32>, vector<1x128xf32>, vector<1x128xf32>, vector<1x128xf32>, vector<3x128xf32> -> vector<8x128xf32>
    %647 = vector.extract_strided_slice %646 {offsets = [0, 0], sizes = [8, 6], strides = [1, 1]} : vector<8x128xf32> to vector<8x6xf32>
    %cst_66 = arith.constant dense<0.000000e+00> : vector<8x128xf32>
    %648 = tpu.matmul %647, %20, %cst_66 {dimension_numbers = #tpu.dot_dimension_numbers<[1], [0], [0], [1], [0, 0, 1, 1], [], []>} : vector<8x6xf32>, vector<6x128xf32>, vector<8x128xf32> -> vector<8x128xf32>
    %649 = vector.broadcast %21 : vector<1x128xf32> to vector<8x128xf32>
    %650 = arith.addf %648, %649 : vector<8x128xf32>
    %651 = tpu.iota {dimensions = array<i32: 1>} : vector<8x128xi32>
    %c3_i32 = arith.constant 3 : i32
    %652 = vector.broadcast %c3_i32 : i32 to vector<8x128xi32>
    %653 = arith.cmpi slt, %651, %652 : vector<8x128xi32>
    %cst_67 = arith.constant -1.000000e+30 : f32
    %654 = vector.broadcast %cst_67 : f32 to vector<8x128xf32>
    %655 = arith.select %653, %650, %654 : vector<8x128xi1>, vector<8x128xf32>
    %cst_68 = arith.constant dense<0xFF800000> : vector<8xf32>
    %656 = vector.multi_reduction <maximumf>, %655, %cst_68 [1] : vector<8x128xf32> to vector<8xf32>
    %657 = vector.shape_cast %656 : vector<8xf32> to vector<8x1xf32>
    %658 = vector.broadcast %657 : vector<8x1xf32> to vector<8x128xf32>
    %659 = arith.subf %655, %658 : vector<8x128xf32>
    %660 = math.exp %659 : vector<8x128xf32>
    %cst_69 = arith.constant dense<0.000000e+00> : vector<8xf32>
    %661 = vector.multi_reduction <add>, %660, %cst_69 [1] : vector<8x128xf32> to vector<8xf32>
    %662 = vector.shape_cast %661 : vector<8xf32> to vector<8x1xf32>
    %663 = math.log %662 : vector<8x1xf32>
    %664 = arith.addf %657, %663 : vector<8x1xf32>
    %665 = vector.broadcast %664 : vector<8x1xf32> to vector<8x128xf32>
    %666 = arith.subf %650, %665 : vector<8x128xf32>
    %c0_70 = arith.constant 0 : index
    %c0_71 = arith.constant 0 : index
    %667 = vector.load %arg2[%c0_70, %c0_71] : memref<8x128xf32, #tpu.memory_space<vmem>>, vector<8x128xf32>
    tpu.vector_store %arg2[%c0_70, %c0_71], %666 {strides = array<i32>} : memref<8x128xf32, #tpu.memory_space<vmem>>, vector<8x128xf32>,
    return
  }
}

</mosaic_0001>

<llo_original>
// kernel: lstm_tagger_forward.1
$region0: #{lstm_tagger_forward.1}
  #allocation0 [shape = 'u32[]', space=smem, size = 0x4, offset = 0x4, fixed_abs, tag = 'smem constant byte address 0x4 - core index']
  #allocation1 [shape = 'u32[144,128]{1,0:T(1,128)}', space=vmem, size = 0x12000, scoped, tag = 'internal scratch']
  %s0 = inlined_call_operand.vmem [shape: f32[72,8], index: 0, kind: input, shape index: {}]
  %s1 = inlined_call_operand.vmem [shape: f32[72,512], index: 1, kind: input, shape index: {}]
  %s2 = inlined_call_operand.vmem [shape: f32[8,128], index: 2, kind: output, shape index: {}]
  %s3 = sld [smem:[#allocation0]]
  $region18: #{lstm_tagger_forward.1} parent=0
    _
  %s5 = ssub.s32 1, %s3
  %s6 = scalar_select 0, %s5, %s3
  // Predicated region
  $region2: #{lstm_tagger_forward.1} parent=0 // pred_check
    _
  $region3: #{lstm_tagger_forward.1} parent=0 // pred_check_branch
    %8 = sbr.rel (0) target = $region5
  $region4: #{lstm_tagger_forward.1} parent=0 // pred_region
    _
  $region5: #{lstm_tagger_forward.1} parent=0 // pred_fallthru
    _
  // Predicated region
  $region6: #{lstm_tagger_forward.1} parent=0 // pred_check
    _
  $region7: #{lstm_tagger_forward.1} parent=0 // pred_check_branch
    %10 = sbr.rel (0) target = $region9
  $region8: #{lstm_tagger_forward.1} parent=0 // pred_region
    _
  $region9: #{lstm_tagger_forward.1} parent=0 // pred_fallthru
    _
  %v11 = vld [vmem:[%s1] sm:$0x7]
  %v12 = vld [vmem:[%s1 + $0x8] sm:$0x7]
  %v13 = vld [vmem:[%s1 + $0x10] sm:$0x7]
  %v14 = vld [vmem:[%s1 + $0x18] sm:$0x7]
  %s15 = scalar_lea.vmem %s1, 64
  %v16 = vld [vmem:[%s15] ss:$8 sm:$0xf]
  %s17 = scalar_lea.vmem %s1, 32
  %v18 = vld [vmem:[%s17] ss:$8 sm:$0xf]
  %v20 = vlaneseq
  %v21 = vshrl.u32 %v20, 7
  %v22 = vsub.s32 0, %v21
  %v23 = vrot.slane %v18, %v22
  %v24 = vlaneseq
  %v25 = vshrl.u32 %v24, 7
  %v26 = vsub.s32 1, %v25
  %v27 = vrot.slane %v18, %v26
  %v28 = vlaneseq
  %v29 = vshrl.u32 %v28, 7
  %v30 = vsub.s32 2, %v29
  %v31 = vrot.slane %v18, %v30
  %v32 = vlaneseq
  %v33 = vshrl.u32 %v32, 7
  %v34 = vsub.s32 3, %v33
  %v35 = vrot.slane %v18, %v34
  %s40 = scalar_lea.vmem %s1, 33
  %v41 = vld [vmem:[%s40] ss:$8 sm:$0xf]
  %v43 = vlaneseq
  %v44 = vshrl.u32 %v43, 7
  %v45 = vsub.s32 0, %v44
  %v46 = vrot.slane %v41, %v45
  %v47 = vlaneseq
  %v48 = vshrl.u32 %v47, 7
  %v49 = vsub.s32 1, %v48
  %v50 = vrot.slane %v41, %v49
  %v51 = vlaneseq
  %v52 = vshrl.u32 %v51, 7
  %v53 = vsub.s32 2, %v52
  %v54 = vrot.slane %v41, %v53
  %v55 = vlaneseq
  %v56 = vshrl.u32 %v55, 7
  %v57 = vsub.s32 3, %v56
  %v58 = vrot.slane %v41, %v57
  %s63 = scalar_lea.vmem %s1, 34
  %v64 = vld [vmem:[%s63] ss:$8 sm:$0xf]
  %v66 = vlaneseq
  %v67 = vshrl.u32 %v66, 7
  %v68 = vsub.s32 0, %v67
  %v69 = vrot.slane %v64, %v68
  %v70 = vlaneseq
  %v71 = vshrl.u32 %v70, 7
  %v72 = vsub.s32 1, %v71
  %v73 = vrot.slane %v64, %v72
  %v74 = vlaneseq
  %v75 = vshrl.u32 %v74, 7
  %v76 = vsub.s32 2, %v75
  %v77 = vrot.slane %v64, %v76
  %v78 = vlaneseq
  %v79 = vshrl.u32 %v78, 7
  %v80 = vsub.s32 3, %v79
  %v81 = vrot.slane %v64, %v80
  %v86 = vld [vmem:[%s1 + $0x60] sm:$0x3f]
  %v87 = vld [vmem:[%s1 + $0x68] sm:$0x3f]
  %v88 = vld [vmem:[%s1 + $0x70] sm:$0x3f]
  %v89 = vld [vmem:[%s1 + $0x78] sm:$0x3f]
  %v90 = vld [vmem:[%s1 + $0x80] sm:$0x7]
  %v91 = vld [vmem:[%s1 + $0x88] sm:$0x7]
  %v92 = vld [vmem:[%s1 + $0x90] sm:$0x7]
  %v93 = vld [vmem:[%s1 + $0x98] sm:$0x7]
  %s94 = scalar_lea.vmem %s1, 192
  %v95 = vld [vmem:[%s94] ss:$8 sm:$0xf]
  %s96 = scalar_lea.vmem %s1, 160
  %v97 = vld [vmem:[%s96] ss:$8 sm:$0xf]
  %s98 = scalar_lea.vmem %s1, 161
  %v99 = vld [vmem:[%s98] ss:$8 sm:$0xf]
  %s100 = scalar_lea.vmem %s1, 162
  %v101 = vld [vmem:[%s100] ss:$8 sm:$0xf]
  %s102 = scalar_lea.vmem %s1, 163
  %v103 = vld [vmem:[%s102] ss:$8 sm:$0xf]
  %s104 = scalar_lea.vmem %s1, 164
  %v105 = vld [vmem:[%s104] ss:$8 sm:$0xf]
  %s106 = scalar_lea.vmem %s1, 165
  %v107 = vld [vmem:[%s106] ss:$8 sm:$0xf]
  %v108 = vld [vmem:[%s1 + $0xe0] sm:$0x3f]
  %v109 = vld [vmem:[%s1 + $0x100] ss:$0 sm:$0xff]
  %v110 = vld [vmem:[%s0] sm:$0xff]
  %v111 = vld [vmem:[%s0 + $0x8] sm:$0xff]
  %v112 = vld [vmem:[%s0 + $0x10] sm:$0xff]
  %v113 = vld [vmem:[%s0 + $0x18] sm:$0xff]
  %v114 = vld [vmem:[%s0 + $0x20] sm:$0xff]
  %v115 = vld [vmem:[%s0 + $0x28] sm:$0xff]
  %v116 = vld [vmem:[%s0 + $0x30] sm:$0xff]
  %v117 = vld [vmem:[%s0 + $0x38] sm:$0xff]
  %v118 = vld [vmem:[%s0 + $0x40] sm:$0xff]
  %v120 = vlaneseq
  %v121 = vshrl.u32 %v120, 7
  %v122 = vsub.s32 0, %v121
  %v123 = vrot.slane %v16, %v122
  %v124 = vlaneseq
  %v125 = vshrl.u32 %v124, 7
  %v126 = vsub.s32 1, %v125
  %v127 = vrot.slane %v16, %v126
  %v128 = vlaneseq
  %v129 = vshrl.u32 %v128, 7
  %v130 = vsub.s32 2, %v129
  %v131 = vrot.slane %v16, %v130
  %v132 = vlaneseq
  %v133 = vshrl.u32 %v132, 7
  %v134 = vsub.s32 3, %v133
  %v135 = vrot.slane %v16, %v134
  %vm140 = vcmask 23552
  %v142 = vsel %vm140, %v110, 0
  %v145 = vsel %vm140, %v111, 0
  %v148 = vsel %vm140, %v112, 0
  %v151 = vsel %vm140, %v113, 0
  %v154 = vsel %vm140, %v114, 0
  %v157 = vsel %vm140, %v115, 0
  %v160 = vsel %vm140, %v116, 0
  %v163 = vsel %vm140, %v117, 0
  %vm165 = vcmask 1042432
  %v167 = vsel %vm165, %v11, 0
  %v170 = vsel %vm165, %v12, 0
  %v173 = vsel %vm165, %v13, 0
  %v176 = vsel %vm165, %v14, 0
  %178 = vmatprep.subr.mxu0 0.0
  %179 = vmatpush1.msra.mxu0 0.0
  %180 = vmatprep.subr.mxu0 0.0
  %181 = vmatpush1.msra.mxu0 0.0
  %182 = vmatprep.subr.mxu0 0.0
  %183 = vmatpush1.msra.mxu0 0.0
  %184 = vmatprep.subr.mxu0 0.0
  %185 = vmatpush1.msra.mxu0 0.0
  %186 = vmatprep.subr.mxu0 0.0
  %187 = vmatpush1.msra.mxu0 0.0
  %188 = vmatprep.subr.mxu0 0.0
  %189 = vmatpush1.msra.mxu0 0.0
  %190 = vmatprep.subr.mxu0 0.0
  %191 = vmatpush1.msra.mxu0 0.0
  %192 = vmatprep.subr.mxu0 0.0
  %193 = vmatpush1.msra.mxu0 0.0
  %194 = vmatprep.subr.mxu0 0.0
  %195 = vmatpush1.msra.mxu0 0.0
  %196 = vmatprep.subr.mxu0 0.0
  %197 = vmatpush1.msra.mxu0 0.0
  %198 = vmatprep.subr.mxu0 0.0
  %199 = vmatpush1.msra.mxu0 0.0
  %200 = vmatprep.subr.mxu0 0.0
  %201 = vmatpush1.msra.mxu0 0.0
  %202 = vmatprep.subr.mxu0 0.0
  %203 = vmatpush1.msra.mxu0 0.0
  %204 = vmatprep.subr.mxu0 0.0
  %205 = vmatpush1.msra.mxu0 0.0
  %206 = vmatprep.subr.mxu0 0.0
  %207 = vmatpush1.msra.mxu0 0.0
  %208 = vmatprep.subr.mxu0 %v170
  %209 = vmatpush1.msra.mxu0 %v167
  %210 = vmatprep.subr.mxu0 0.0
  %211 = vmatpush2.msra.mxu0 0.0
  %212 = vmatprep.subr.mxu0 0.0
  %213 = vmatpush2.msra.mxu0 0.0
  %214 = vmatprep.subr.mxu0 0.0
  %215 = vmatpush2.msra.mxu0 0.0
  %216 = vmatprep.subr.mxu0 0.0
  %217 = vmatpush2.msra.mxu0 0.0
  %218 = vmatprep.subr.mxu0 0.0
  %219 = vmatpush2.msra.mxu0 0.0
  %220 = vmatprep.subr.mxu0 0.0
  %221 = vmatpush2.msra.mxu0 0.0
  %222 = vmatprep.subr.mxu0 0.0
  %223 = vmatpush2.msra.mxu0 0.0
  %224 = vmatprep.subr.mxu0 0.0
  %225 = vmatpush2.msra.mxu0 0.0
  %226 = vmatprep.subr.mxu0 0.0
  %227 = vmatpush2.msra.mxu0 0.0
  %228 = vmatprep.subr.mxu0 0.0
  %229 = vmatpush2.msra.mxu0 0.0
  %230 = vmatprep.subr.mxu0 0.0
  %231 = vmatpush2.msra.mxu0 0.0
  %232 = vmatprep.subr.mxu0 0.0
  %233 = vmatpush2.msra.mxu0 0.0
  %234 = vmatprep.subr.mxu0 0.0
  %235 = vmatpush2.msra.mxu0 0.0
  %236 = vmatprep.subr.mxu0 0.0
  %237 = vmatpush2.msra.mxu0 0.0
  %238 = vmatprep.subr.mxu0 0.0
  %239 = vmatpush2.msra.mxu0 0.0
  %240 = vmatprep.subr.mxu0 0.0
  %241 = vmatpush2.msra.mxu0 0.0
  %242 = vmatprep.mubr.f32.mxu0 0.0
  %243 = vmatmul.mubr.f32.gmra.mxu0 %v142
  %v244 = vpop.f32.mrf.mxu0
  %v245 = vadd.f32 %v123, %v244
  %v246 = vpop.f32.mrf.mxu0
  %v247 = vadd.f32 %v127, %v246
  %248 = vmatprep.mubr.f32.mxu0 0.0
  %249 = vmatmul.mubr.f32.gmra.mxu0 %v145
  %v250 = vpop.f32.mrf.mxu0
  %v251 = vadd.f32 %v123, %v250
  %v252 = vpop.f32.mrf.mxu0
  %v253 = vadd.f32 %v127, %v252
  %254 = vmatprep.mubr.f32.mxu0 0.0
  %255 = vmatmul.mubr.f32.gmra.mxu0 %v148
  %v256 = vpop.f32.mrf.mxu0
  %v257 = vadd.f32 %v123, %v256
  %v258 = vpop.f32.mrf.mxu0
  %v259 = vadd.f32 %v127, %v258
  %260 = vmatprep.mubr.f32.mxu0 0.0
  %261 = vmatmul.mubr.f32.gmra.mxu0 %v151
  %v262 = vpop.f32.mrf.mxu0
  %v263 = vadd.f32 %v123, %v262
  %v264 = vpop.f32.mrf.mxu0
  %v265 = vadd.f32 %v127, %v264
  %266 = vmatprep.mubr.f32.mxu0 0.0
  %267 = vmatmul.mubr.f32.gmra.mxu0 %v154
  %v268 = vpop.f32.mrf.mxu0
  %v269 = vadd.f32 %v123, %v268
  %v270 = vpop.f32.mrf.mxu0
  %v271 = vadd.f32 %v127, %v270
  %272 = vmatprep.mubr.f32.mxu0 0.0
  %273 = vmatmul.mubr.f32.gmra.mxu0 %v157
  %v274 = vpop.f32.mrf.mxu0
  %v275 = vadd.f32 %v123, %v274
  %v276 = vpop.f32.mrf.mxu0
  %v277 = vadd.f32 %v127, %v276
  %278 = vmatprep.mubr.f32.mxu0 0.0
  %279 = vmatmul.mubr.f32.gmra.mxu0 %v160
  %v280 = vpop.f32.mrf.mxu0
  %v281 = vadd.f32 %v123, %v280
  %v282 = vpop.f32.mrf.mxu0
  %v283 = vadd.f32 %v127, %v282
  %284 = vmatprep.mubr.f32.mxu0 0.0
  %285 = vmatmul.mubr.f32.gmra.mxu0 %v163
  %v286 = vpop.f32.mrf.mxu0
  %v287 = vadd.f32 %v123, %v286
  %v288 = vpop.f32.mrf.mxu0
  %v289 = vadd.f32 %v127, %v288
  %290 = vdwg.mxu0
  %291 = vmatprep.subr.mxu0 0.0
  %292 = vmatpush1.msra.mxu0 0.0
  %293 = vmatprep.subr.mxu0 0.0
  %294 = vmatpush1.msra.mxu0 0.0
  %295 = vmatprep.subr.mxu0 0.0
  %296 = vmatpush1.msra.mxu0 0.0
  %297 = vmatprep.subr.mxu0 0.0
  %298 = vmatpush1.msra.mxu0 0.0
  %299 = vmatprep.subr.mxu0 0.0
  %300 = vmatpush1.msra.mxu0 0.0
  %301 = vmatprep.subr.mxu0 0.0
  %302 = vmatpush1.msra.mxu0 0.0
  %303 = vmatprep.subr.mxu0 0.0
  %304 = vmatpush1.msra.mxu0 0.0
  %305 = vmatprep.subr.mxu0 0.0
  %306 = vmatpush1.msra.mxu0 0.0
  %307 = vmatprep.subr.mxu0 0.0
  %308 = vmatpush1.msra.mxu0 0.0
  %309 = vmatprep.subr.mxu0 0.0
  %310 = vmatpush1.msra.mxu0 0.0
  %311 = vmatprep.subr.mxu0 0.0
  %312 = vmatpush1.msra.mxu0 0.0
  %313 = vmatprep.subr.mxu0 0.0
  %314 = vmatpush1.msra.mxu0 0.0
  %315 = vmatprep.subr.mxu0 0.0
  %316 = vmatpush1.msra.mxu0 0.0
  %317 = vmatprep.subr.mxu0 0.0
  %318 = vmatpush1.msra.mxu0 0.0
  %319 = vmatprep.subr.mxu0 0.0
  %320 = vmatpush1.msra.mxu0 0.0
  %321 = vmatprep.subr.mxu0 %v176
  %322 = vmatpush1.msra.mxu0 %v173
  %323 = vmatprep.subr.mxu0 0.0
  %324 = vmatpush2.msra.mxu0 0.0
  %325 = vmatprep.subr.mxu0 0.0
  %326 = vmatpush2.msra.mxu0 0.0
  %327 = vmatprep.subr.mxu0 0.0
  %328 = vmatpush2.msra.mxu0 0.0
  %329 = vmatprep.subr.mxu0 0.0
  %330 = vmatpush2.msra.mxu0 0.0
  %331 = vmatprep.subr.mxu0 0.0
  %332 = vmatpush2.msra.mxu0 0.0
  %333 = vmatprep.subr.mxu0 0.0
  %334 = vmatpush2.msra.mxu0 0.0
  %335 = vmatprep.subr.mxu0 0.0
  %336 = vmatpush2.msra.mxu0 0.0
  %337 = vmatprep.subr.mxu0 0.0
  %338 = vmatpush2.msra.mxu0 0.0
  %339 = vmatprep.subr.mxu0 0.0
  %340 = vmatpush2.msra.mxu0 0.0
  %341 = vmatprep.subr.mxu0 0.0
  %342 = vmatpush2.msra.mxu0 0.0
  %343 = vmatprep.subr.mxu0 0.0
  %344 = vmatpush2.msra.mxu0 0.0
  %345 = vmatprep.subr.mxu0 0.0
  %346 = vmatpush2.msra.mxu0 0.0
  %347 = vmatprep.subr.mxu0 0.0
  %348 = vmatpush2.msra.mxu0 0.0
  %349 = vmatprep.subr.mxu0 0.0
  %350 = vmatpush2.msra.mxu0 0.0
  %351 = vmatprep.subr.mxu0 0.0
  %352 = vmatpush2.msra.mxu0 0.0
  %353 = vmatprep.subr.mxu0 0.0
  %354 = vmatpush2.msra.mxu0 0.0
  %355 = vmatprep.mubr.f32.mxu0 0.0
  %356 = vmatmul.mubr.f32.gmra.mxu0 %v142
  %v357 = vpop.f32.mrf.mxu0
  %v358 = vadd.f32 %v131, %v357
  %v359 = vpop.f32.mrf.mxu0
  %v360 = vadd.f32 %v135, %v359
  %361 = vmatprep.mubr.f32.mxu0 0.0
  %362 = vmatmul.mubr.f32.gmra.mxu0 %v145
  %v363 = vpop.f32.mrf.mxu0
  %v364 = vadd.f32 %v131, %v363
  %v365 = vpop.f32.mrf.mxu0
  %v366 = vadd.f32 %v135, %v365
  %367 = vmatprep.mubr.f32.mxu0 0.0
  %368 = vmatmul.mubr.f32.gmra.mxu0 %v148
  %v369 = vpop.f32.mrf.mxu0
  %v370 = vadd.f32 %v131, %v369
  %v371 = vpop.f32.mrf.mxu0
  %v372 = vadd.f32 %v135, %v371
  %373 = vmatprep.mubr.f32.mxu0 0.0
  %374 = vmatmul.mubr.f32.gmra.mxu0 %v151
  %v375 = vpop.f32.mrf.mxu0
  %v376 = vadd.f32 %v131, %v375
  %v377 = vpop.f32.mrf.mxu0
  %v378 = vadd.f32 %v135, %v377
  %379 = vmatprep.mubr.f32.mxu0 0.0
  %380 = vmatmul.mubr.f32.gmra.mxu0 %v154
  %v381 = vpop.f32.mrf.mxu0
  %v382 = vadd.f32 %v131, %v381
  %v383 = vpop.f32.mrf.mxu0
  %v384 = vadd.f32 %v135, %v383
  %385 = vmatprep.mubr.f32.mxu0 0.0
  %386 = vmatmul.mubr.f32.gmra.mxu0 %v157
  %v387 = vpop.f32.mrf.mxu0
  %v388 = vadd.f32 %v131, %v387
  %v389 = vpop.f32.mrf.mxu0
  %v390 = vadd.f32 %v135, %v389
  %391 = vmatprep.mubr.f32.mxu0 0.0
  %392 = vmatmul.mubr.f32.gmra.mxu0 %v160
  %v393 = vpop.f32.mrf.mxu0
  %v394 = vadd.f32 %v131, %v393
  %v395 = vpop.f32.mrf.mxu0
  %v396 = vadd.f32 %v135, %v395
  %397 = vmatprep.mubr.f32.mxu0 0.0
  %398 = vmatmul.mubr.f32.gmra.mxu0 %v163
  %v399 = vpop.f32.mrf.mxu0
  %v400 = vadd.f32 %v131, %v399
  %v401 = vpop.f32.mrf.mxu0
  %v402 = vadd.f32 %v135, %v401
  %403 = vdwg.mxu0
  %v404 = vmul.f32 %v23, 0.0
  %v405 = vmul.f32 %v27, 0.0
  %v406 = vmul.f32 %v31, 0.0
  %v407 = vmul.f32 %v35, 0.0
  %v408 = vmul.f32 %v46, 0.0
  %v409 = vmul.f32 %v50, 0.0
  %v410 = vmul.f32 %v54, 0.0
  %v411 = vmul.f32 %v58, 0.0
  %v412 = vadd.f32 %v404, %v408
  %v413 = vadd.f32 %v405, %v409
  %v414 = vadd.f32 %v406, %v410
  %v415 = vadd.f32 %v407, %v411
  %v416 = vmul.f32 %v69, 0.0
  %v417 = vmul.f32 %v73, 0.0
  %v418 = vmul.f32 %v77, 0.0
  %v419 = vmul.f32 %v81, 0.0
  %v420 = vadd.f32 %v412, %v416
  %v421 = vadd.f32 %v413, %v417
  %v422 = vadd.f32 %v414, %v418
  %v423 = vadd.f32 %v415, %v419
  %v424 = vadd.f32 %v245, %v420
  %v425 = vadd.f32 %v247, %v421
  %v426 = vadd.f32 %v358, %v422
  %v427 = vadd.f32 %v360, %v423
  %v428 = vxor.u32 %v424, 2147483648
  %v429 = vmul.f32 %v428, 1.442695
  %v430 = vpow.pop %v429
  %v431 = vadd.f32 %v430, 1.0
  %v432 = vrcp.pop %v431
  %v433 = vmul.f32 1.0, %v432
  %v434 = vxor.u32 %v425, 2147483648
  %v435 = vmul.f32 %v434, 1.442695
  %v436 = vpow.pop %v435
  %v437 = vadd.f32 %v436, 1.0
  %v438 = vrcp.pop %v437
  %v439 = vmul.f32 1.0, %v438
  %v440 = vtanh.pop %v426
  %v441 = vxor.u32 %v427, 2147483648
  %v442 = vmul.f32 %v441, 1.442695
  %v443 = vpow.pop %v442
  %v444 = vadd.f32 %v443, 1.0
  %v445 = vrcp.pop %v444
  %v446 = vmul.f32 1.0, %v445
  %v447 = vmul.f32 %v439, 0.0
  %v448 = vmul.f32 %v433, %v440
  %v449 = vadd.f32 %v447, %v448
  %v450 = vtanh.pop %v449
  %v451 = vmul.f32 %v446, %v450
  %453 = vset.pattern.permute.xlu0 0
  %454 = vperm.xlu0 %453, %v451
  %v455 = vpop.permute.xlu0 %454
  %v457 = vmul.f32 %v455, %v23
  %v458 = vmul.f32 %v455, %v27
  %v459 = vmul.f32 %v455, %v31
  %v460 = vmul.f32 %v455, %v35
  %461 = vset.pattern.permute.xlu0 1
  %462 = vperm.xlu0 %461, %v451
  %v463 = vpop.permute.xlu0 %462
  %v465 = vmul.f32 %v463, %v46
  %v466 = vmul.f32 %v463, %v50
  %v467 = vmul.f32 %v463, %v54
  %v468 = vmul.f32 %v463, %v58
  %v469 = vadd.f32 %v457, %v465
  %v470 = vadd.f32 %v458, %v466
  %v471 = vadd.f32 %v459, %v467
  %v472 = vadd.f32 %v460, %v468
  %473 = vset.pattern.permute.xlu0 2
  %474 = vperm.xlu0 %473, %v451
  %v475 = vpop.permute.xlu0 %474
  %v477 = vmul.f32 %v475, %v69
  %v478 = vmul.f32 %v475, %v73
  %v479 = vmul.f32 %v475, %v77
  %v480 = vmul.f32 %v475, %v81
  %v481 = vadd.f32 %v469, %v477
  %v482 = vadd.f32 %v470, %v478
  %v483 = vadd.f32 %v471, %v479
  %v484 = vadd.f32 %v472, %v480
  %v485 = vadd.f32 %v251, %v481
  %v486 = vadd.f32 %v253, %v482
  %v487 = vadd.f32 %v364, %v483
  %v488 = vadd.f32 %v366, %v484
  %v489 = vxor.u32 %v485, 2147483648
  %v490 = vmul.f32 %v489, 1.442695
  %v491 = vpow.pop %v490
  %v492 = vadd.f32 %v491, 1.0
  %v493 = vrcp.pop %v492
  %v494 = vmul.f32 1.0, %v493
  %v495 = vxor.u32 %v486, 2147483648
  %v496 = vmul.f32 %v495, 1.442695
  %v497 = vpow.pop %v496
  %v498 = vadd.f32 %v497, 1.0
  %v499 = vrcp.pop %v498
  %v500 = vmul.f32 1.0, %v499
  %v501 = vtanh.pop %v487
  %v502 = vxor.u32 %v488, 2147483648
  %v503 = vmul.f32 %v502, 1.442695
  %v504 = vpow.pop %v503
  %v505 = vadd.f32 %v504, 1.0
  %v506 = vrcp.pop %v505
  %v507 = vmul.f32 1.0, %v506
  %v508 = vmul.f32 %v500, %v449
  %v509 = vmul.f32 %v494, %v501
  %v510 = vadd.f32 %v508, %v509
  %v511 = vtanh.pop %v510
  %v512 = vmul.f32 %v507, %v511
  %514 = vset.pattern.permute.xlu0 0
  %515 = vperm.xlu0 %514, %v512
  %v516 = vpop.permute.xlu0 %515
  %v518 = vmul.f32 %v516, %v23
  %v519 = vmul.f32 %v516, %v27
  %v520 = vmul.f32 %v516, %v31
  %v521 = vmul.f32 %v516, %v35
  %522 = vset.pattern.permute.xlu0 1
  %523 = vperm.xlu0 %522, %v512
  %v524 = vpop.permute.xlu0 %523
  %v526 = vmul.f32 %v524, %v46
  %v527 = vmul.f32 %v524, %v50
  %v528 = vmul.f32 %v524, %v54
  %v529 = vmul.f32 %v524, %v58
  %v530 = vadd.f32 %v518, %v526
  %v531 = vadd.f32 %v519, %v527
  %v532 = vadd.f32 %v520, %v528
  %v533 = vadd.f32 %v521, %v529
  %534 = vset.pattern.permute.xlu0 2
  %535 = vperm.xlu0 %534, %v512
  %v536 = vpop.permute.xlu0 %535
  %v538 = vmul.f32 %v536, %v69
  %v539 = vmul.f32 %v536, %v73
  %v540 = vmul.f32 %v536, %v77
  %v541 = vmul.f32 %v536, %v81
  %v542 = vadd.f32 %v530, %v538
  %v543 = vadd.f32 %v531, %v539
  %v544 = vadd.f32 %v532, %v540
  %v545 = vadd.f32 %v533, %v541
  %v546 = vadd.f32 %v257, %v542
  %v547 = vadd.f32 %v259, %v543
  %v548 = vadd.f32 %v370, %v544
  %v549 = vadd.f32 %v372, %v545
  %v550 = vxor.u32 %v546, 2147483648
  %v551 = vmul.f32 %v550, 1.442695
  %v552 = vpow.pop %v551
  %v553 = vadd.f32 %v552, 1.0
  %v554 = vrcp.pop %v553
  %v555 = vmul.f32 1.0, %v554
  %v556 = vxor.u32 %v547, 2147483648
  %v557 = vmul.f32 %v556, 1.442695
  %v558 = vpow.pop %v557
  %v559 = vadd.f32 %v558, 1.0
  %v560 = vrcp.pop %v559
  %v561 = vmul.f32 1.0, %v560
  %v562 = vtanh.pop %v548
  %v563 = vxor.u32 %v549, 2147483648
  %v564 = vmul.f32 %v563, 1.442695
  %v565 = vpow.pop %v564
  %v566 = vadd.f32 %v565, 1.0
  %v567 = vrcp.pop %v566
  %v568 = vmul.f32 1.0, %v567
  %v569 = vmul.f32 %v561, %v510
  %v570 = vmul.f32 %v555, %v562
  %v571 = vadd.f32 %v569, %v570
  %v572 = vtanh.pop %v571
  %v573 = vmul.f32 %v568, %v572
  %575 = vset.pattern.permute.xlu0 0
  %576 = vperm.xlu0 %575, %v573
  %v577 = vpop.permute.xlu0 %576
  %v579 = vmul.f32 %v577, %v23
  %v580 = vmul.f32 %v577, %v27
  %v581 = vmul.f32 %v577, %v31
  %v582 = vmul.f32 %v577, %v35
  %583 = vset.pattern.permute.xlu0 1
  %584 = vperm.xlu0 %583, %v573
  %v585 = vpop.permute.xlu0 %584
  %v587 = vmul.f32 %v585, %v46
  %v588 = vmul.f32 %v585, %v50
  %v589 = vmul.f32 %v585, %v54
  %v590 = vmul.f32 %v585, %v58
  %v591 = vadd.f32 %v579, %v587
  %v592 = vadd.f32 %v580, %v588
  %v593 = vadd.f32 %v581, %v589
  %v594 = vadd.f32 %v582, %v590
  %595 = vset.pattern.permute.xlu0 2
  %596 = vperm.xlu0 %595, %v573
  %v597 = vpop.permute.xlu0 %596
  %v599 = vmul.f32 %v597, %v69
  %v600 = vmul.f32 %v597, %v73
  %v601 = vmul.f32 %v597, %v77
  %v602 = vmul.f32 %v597, %v81
  %v603 = vadd.f32 %v591, %v599
  %v604 = vadd.f32 %v592, %v600
  %v605 = vadd.f32 %v593, %v601
  %v606 = vadd.f32 %v594, %v602
  %v607 = vadd.f32 %v263, %v603
  %v608 = vadd.f32 %v265, %v604
  %v609 = vadd.f32 %v376, %v605
  %v610 = vadd.f32 %v378, %v606
  %v611 = vxor.u32 %v607, 2147483648
  %v612 = vmul.f32 %v611, 1.442695
  %v613 = vpow.pop %v612
  %v614 = vadd.f32 %v613, 1.0
  %v615 = vrcp.pop %v614
  %v616 = vmul.f32 1.0, %v615
  %v617 = vxor.u32 %v608, 2147483648
  %v618 = vmul.f32 %v617, 1.442695
  %v619 = vpow.pop %v618
  %v620 = vadd.f32 %v619, 1.0
  %v621 = vrcp.pop %v620
  %v622 = vmul.f32 1.0, %v621
  %v623 = vtanh.pop %v609
  %v624 = vxor.u32 %v610, 2147483648
  %v625 = vmul.f32 %v624, 1.442695
  %v626 = vpow.pop %v625
  %v627 = vadd.f32 %v626, 1.0
  %v628 = vrcp.pop %v627
  %v629 = vmul.f32 1.0, %v628
  %v630 = vmul.f32 %v622, %v571
  %v631 = vmul.f32 %v616, %v623
  %v632 = vadd.f32 %v630, %v631
  %v633 = vtanh.pop %v632
  %v634 = vmul.f32 %v629, %v633
  %636 = vset.pattern.permute.xlu0 0
  %637 = vperm.xlu0 %636, %v634
  %v638 = vpop.permute.xlu0 %637
  %v640 = vmul.f32 %v638, %v23
  %v641 = vmul.f32 %v638, %v27
  %v642 = vmul.f32 %v638, %v31
  %v643 = vmul.f32 %v638, %v35
  %644 = vset.pattern.permute.xlu0 1
  %645 = vperm.xlu0 %644, %v634
  %v646 = vpop.permute.xlu0 %645
  %v648 = vmul.f32 %v646, %v46
  %v649 = vmul.f32 %v646, %v50
  %v650 = vmul.f32 %v646, %v54
  %v651 = vmul.f32 %v646, %v58
  %v652 = vadd.f32 %v640, %v648
  %v653 = vadd.f32 %v641, %v649
  %v654 = vadd.f32 %v642, %v650
  %v655 = vadd.f32 %v643, %v651
  %656 = vset.pattern.permute.xlu0 2
  %657 = vperm.xlu0 %656, %v634
  %v658 = vpop.permute.xlu0 %657
  %v660 = vmul.f32 %v658, %v69
  %v661 = vmul.f32 %v658, %v73
  %v662 = vmul.f32 %v658, %v77
  %v663 = vmul.f32 %v658, %v81
  %v664 = vadd.f32 %v652, %v660
  %v665 = vadd.f32 %v653, %v661
  %v666 = vadd.f32 %v654, %v662
  %v667 = vadd.f32 %v655, %v663
  %v668 = vadd.f32 %v269, %v664
  %v669 = vadd.f32 %v271, %v665
  %v670 = vadd.f32 %v382, %v666
  %v671 = vadd.f32 %v384, %v667
  %v672 = vxor.u32 %v668, 2147483648
  %v673 = vmul.f32 %v672, 1.442695
  %v674 = vpow.pop %v673
  %v675 = vadd.f32 %v674, 1.0
  %v676 = vrcp.pop %v675
  %v677 = vmul.f32 1.0, %v676
  %v678 = vxor.u32 %v669, 2147483648
  %v679 = vmul.f32 %v678, 1.442695
  %v680 = vpow.pop %v679
  %v681 = vadd.f32 %v680, 1.0
  %v682 = vrcp.pop %v681
  %v683 = vmul.f32 1.0, %v682
  %v684 = vtanh.pop %v670
  %v685 = vxor.u32 %v671, 2147483648
  %v686 = vmul.f32 %v685, 1.442695
  %v687 = vpow.pop %v686
  %v688 = vadd.f32 %v687, 1.0
  %v689 = vrcp.pop %v688
  %v690 = vmul.f32 1.0, %v689
  %v691 = vmul.f32 %v683, %v632
  %v692 = vmul.f32 %v677, %v684
  %v693 = vadd.f32 %v691, %v692
  %v694 = vtanh.pop %v693
  %v695 = vmul.f32 %v690, %v694
  %697 = vset.pattern.permute.xlu0 0
  %698 = vperm.xlu0 %697, %v695
  %v699 = vpop.permute.xlu0 %698
  %v701 = vmul.f32 %v699, %v23
  %v702 = vmul.f32 %v699, %v27
  %v703 = vmul.f32 %v699, %v31
  %v704 = vmul.f32 %v699, %v35
  %705 = vset.pattern.permute.xlu0 1
  %706 = vperm.xlu0 %705, %v695
  %v707 = vpop.permute.xlu0 %706
  %v709 = vmul.f32 %v707, %v46
  %v710 = vmul.f32 %v707, %v50
  %v711 = vmul.f32 %v707, %v54
  %v712 = vmul.f32 %v707, %v58
  %v713 = vadd.f32 %v701, %v709
  %v714 = vadd.f32 %v702, %v710
  %v715 = vadd.f32 %v703, %v711
  %v716 = vadd.f32 %v704, %v712
  %717 = vset.pattern.permute.xlu0 2
  %718 = vperm.xlu0 %717, %v695
  %v719 = vpop.permute.xlu0 %718
  %v721 = vmul.f32 %v719, %v69
  %v722 = vmul.f32 %v719, %v73
  %v723 = vmul.f32 %v719, %v77
  %v724 = vmul.f32 %v719, %v81
  %v725 = vadd.f32 %v713, %v721
  %v726 = vadd.f32 %v714, %v722
  %v727 = vadd.f32 %v715, %v723
  %v728 = vadd.f32 %v716, %v724
  %v729 = vadd.f32 %v275, %v725
  %v730 = vadd.f32 %v277, %v726
  %v731 = vadd.f32 %v388, %v727
  %v732 = vadd.f32 %v390, %v728
  %v733 = vxor.u32 %v729, 2147483648
  %v734 = vmul.f32 %v733, 1.442695
  %v735 = vpow.pop %v734
  %v736 = vadd.f32 %v735, 1.0
  %v737 = vrcp.pop %v736
  %v738 = vmul.f32 1.0, %v737
  %v739 = vxor.u32 %v730, 2147483648
  %v740 = vmul.f32 %v739, 1.442695
  %v741 = vpow.pop %v740
  %v742 = vadd.f32 %v741, 1.0
  %v743 = vrcp.pop %v742
  %v744 = vmul.f32 1.0, %v743
  %v745 = vtanh.pop %v731
  %v746 = vxor.u32 %v732, 2147483648
  %v747 = vmul.f32 %v746, 1.442695
  %v748 = vpow.pop %v747
  %v749 = vadd.f32 %v748, 1.0
  %v750 = vrcp.pop %v749
  %v751 = vmul.f32 1.0, %v750
  %v752 = vmul.f32 %v744, %v693
  %v753 = vmul.f32 %v738, %v745
  %v754 = vadd.f32 %v752, %v753
  %v755 = vtanh.pop %v754
  %v756 = vmul.f32 %v751, %v755
  %758 = vset.pattern.permute.xlu0 0
  %759 = vperm.xlu0 %758, %v756
  %v760 = vpop.permute.xlu0 %759
  %v762 = vmul.f32 %v760, %v23
  %v763 = vmul.f32 %v760, %v27
  %v764 = vmul.f32 %v760, %v31
  %v765 = vmul.f32 %v760, %v35
  %766 = vset.pattern.permute.xlu0 1
  %767 = vperm.xlu0 %766, %v756
  %v768 = vpop.permute.xlu0 %767
  %v770 = vmul.f32 %v768, %v46
  %v771 = vmul.f32 %v768, %v50
  %v772 = vmul.f32 %v768, %v54
  %v773 = vmul.f32 %v768, %v58
  %v774 = vadd.f32 %v762, %v770
  %v775 = vadd.f32 %v763, %v771
  %v776 = vadd.f32 %v764, %v772
  %v777 = vadd.f32 %v765, %v773
  %778 = vset.pattern.permute.xlu0 2
  %779 = vperm.xlu0 %778, %v756
  %v780 = vpop.permute.xlu0 %779
  %v782 = vmul.f32 %v780, %v69
  %v783 = vmul.f32 %v780, %v73
  %v784 = vmul.f32 %v780, %v77
  %v785 = vmul.f32 %v780, %v81
  %v786 = vadd.f32 %v774, %v782
  %v787 = vadd.f32 %v775, %v783
  %v788 = vadd.f32 %v776, %v784
  %v789 = vadd.f32 %v777, %v785
  %v790 = vadd.f32 %v281, %v786
  %v791 = vadd.f32 %v283, %v787
  %v792 = vadd.f32 %v394, %v788
  %v793 = vadd.f32 %v396, %v789
  %v794 = vxor.u32 %v790, 2147483648
  %v795 = vmul.f32 %v794, 1.442695
  %v796 = vpow.pop %v795
  %v797 = vadd.f32 %v796, 1.0
  %v798 = vrcp.pop %v797
  %v799 = vmul.f32 1.0, %v798
  %v800 = vxor.u32 %v791, 2147483648
  %v801 = vmul.f32 %v800, 1.442695
  %v802 = vpow.pop %v801
  %v803 = vadd.f32 %v802, 1.0
  %v804 = vrcp.pop %v803
  %v805 = vmul.f32 1.0, %v804
  %v806 = vtanh.pop %v792
  %v807 = vxor.u32 %v793, 2147483648
  %v808 = vmul.f32 %v807, 1.442695
  %v809 = vpow.pop %v808
  %v810 = vadd.f32 %v809, 1.0
  %v811 = vrcp.pop %v810
  %v812 = vmul.f32 1.0, %v811
  %v813 = vmul.f32 %v805, %v754
  %v814 = vmul.f32 %v799, %v806
  %v815 = vadd.f32 %v813, %v814
  %v816 = vtanh.pop %v815
  %v817 = vmul.f32 %v812, %v816
  %819 = vset.pattern.permute.xlu0 0
  %820 = vperm.xlu0 %819, %v817
  %v821 = vpop.permute.xlu0 %820
  %v823 = vmul.f32 %v821, %v23
  %v824 = vmul.f32 %v821, %v27
  %v825 = vmul.f32 %v821, %v31
  %v826 = vmul.f32 %v821, %v35
  %827 = vset.pattern.permute.xlu0 1
  %828 = vperm.xlu0 %827, %v817
  %v829 = vpop.permute.xlu0 %828
  %v831 = vmul.f32 %v829, %v46
  %v832 = vmul.f32 %v829, %v50
  %v833 = vmul.f32 %v829, %v54
  %v834 = vmul.f32 %v829, %v58
  %v835 = vadd.f32 %v823, %v831
  %v836 = vadd.f32 %v824, %v832
  %v837 = vadd.f32 %v825, %v833
  %v838 = vadd.f32 %v826, %v834
  %839 = vset.pattern.permute.xlu0 2
  %840 = vperm.xlu0 %839, %v817
  %v841 = vpop.permute.xlu0 %840
  %v843 = vmul.f32 %v841, %v69
  %v844 = vmul.f32 %v841, %v73
  %v845 = vmul.f32 %v841, %v77
  %v846 = vmul.f32 %v841, %v81
  %v847 = vadd.f32 %v835, %v843
  %v848 = vadd.f32 %v836, %v844
  %v849 = vadd.f32 %v837, %v845
  %v850 = vadd.f32 %v838, %v846
  %v851 = vadd.f32 %v287, %v847
  %v852 = vadd.f32 %v289, %v848
  %v853 = vadd.f32 %v400, %v849
  %v854 = vadd.f32 %v402, %v850
  %v855 = vxor.u32 %v851, 2147483648
  %v856 = vmul.f32 %v855, 1.442695
  %v857 = vpow.pop %v856
  %v858 = vadd.f32 %v857, 1.0
  %v859 = vrcp.pop %v858
  %v860 = vmul.f32 1.0, %v859
  %v861 = vxor.u32 %v852, 2147483648
  %v862 = vmul.f32 %v861, 1.442695
  %v863 = vpow.pop %v862
  %v864 = vadd.f32 %v863, 1.0
  %v865 = vrcp.pop %v864
  %v866 = vmul.f32 1.0, %v865
  %v867 = vtanh.pop %v853
  %v868 = vxor.u32 %v854, 2147483648
  %v869 = vmul.f32 %v868, 1.442695
  %v870 = vpow.pop %v869
  %v871 = vadd.f32 %v870, 1.0
  %v872 = vrcp.pop %v871
  %v873 = vmul.f32 1.0, %v872
  %v874 = vmul.f32 %v866, %v815
  %v875 = vmul.f32 %v860, %v867
  %v876 = vadd.f32 %v874, %v875
  %v877 = vtanh.pop %v876
  %v878 = vmul.f32 %v873, %v877
  %v880 = vsel %vm140, %v878, 0
  %v883 = vsel %vm165, %v90, 0
  %v886 = vsel %vm165, %v91, 0
  %v889 = vsel %vm165, %v92, 0
  %v892 = vsel %vm165, %v93, 0
  %894 = vmatprep.subr.mxu0 0.0
  %895 = vmatpush1.msra.mxu0 0.0
  %896 = vmatprep.subr.mxu0 0.0
  %897 = vmatpush1.msra.mxu0 0.0
  %898 = vmatprep.subr.mxu0 0.0
  %899 = vmatpush1.msra.mxu0 0.0
  %900 = vmatprep.subr.mxu0 0.0
  %901 = vmatpush1.msra.mxu0 0.0
  %902 = vmatprep.subr.mxu0 0.0
  %903 = vmatpush1.msra.mxu0 0.0
  %904 = vmatprep.subr.mxu0 0.0
  %905 = vmatpush1.msra.mxu0 0.0
  %906 = vmatprep.subr.mxu0 0.0
  %907 = vmatpush1.msra.mxu0 0.0
  %908 = vmatprep.subr.mxu0 0.0
  %909 = vmatpush1.msra.mxu0 0.0
  %910 = vmatprep.subr.mxu0 0.0
  %911 = vmatpush1.msra.mxu0 0.0
  %912 = vmatprep.subr.mxu0 0.0
  %913 = vmatpush1.msra.mxu0 0.0
  %914 = vmatprep.subr.mxu0 0.0
  %915 = vmatpush1.msra.mxu0 0.0
  %916 = vmatprep.subr.mxu0 0.0
  %917 = vmatpush1.msra.mxu0 0.0
  %918 = vmatprep.subr.mxu0 0.0
  %919 = vmatpush1.msra.mxu0 0.0
  %920 = vmatprep.subr.mxu0 0.0
  %921 = vmatpush1.msra.mxu0 0.0
  %922 = vmatprep.subr.mxu0 0.0
  %923 = vmatpush1.msra.mxu0 0.0
  %924 = vmatprep.subr.mxu0 %v886
  %925 = vmatpush1.msra.mxu0 %v883
  %926 = vmatprep.subr.mxu0 0.0
  %927 = vmatpush2.msra.mxu0 0.0
  %928 = vmatprep.subr.mxu0 0.0
  %929 = vmatpush2.msra.mxu0 0.0
  %930 = vmatprep.subr.mxu0 0.0
  %931 = vmatpush2.msra.mxu0 0.0
  %932 = vmatprep.subr.mxu0 0.0
  %933 = vmatpush2.msra.mxu0 0.0
  %934 = vmatprep.subr.mxu0 0.0
  %935 = vmatpush2.msra.mxu0 0.0
  %936 = vmatprep.subr.mxu0 0.0
  %937 = vmatpush2.msra.mxu0 0.0
  %938 = vmatprep.subr.mxu0 0.0
  %939 = vmatpush2.msra.mxu0 0.0
  %940 = vmatprep.subr.mxu0 0.0
  %941 = vmatpush2.msra.mxu0 0.0
  %942 = vmatprep.subr.mxu0 0.0
  %943 = vmatpush2.msra.mxu0 0.0
  %944 = vmatprep.subr.mxu0 0.0
  %945 = vmatpush2.msra.mxu0 0.0
  %946 = vmatprep.subr.mxu0 0.0
  %947 = vmatpush2.msra.mxu0 0.0
  %948 = vmatprep.subr.mxu0 0.0
  %949 = vmatpush2.msra.mxu0 0.0
  %950 = vmatprep.subr.mxu0 0.0
  %951 = vmatpush2.msra.mxu0 0.0
  %952 = vmatprep.subr.mxu0 0.0
  %953 = vmatpush2.msra.mxu0 0.0
  %954 = vmatprep.subr.mxu0 0.0
  %955 = vmatpush2.msra.mxu0 0.0
  %956 = vmatprep.subr.mxu0 0.0
  %957 = vmatpush2.msra.mxu0 0.0
  %958 = vmatprep.mubr.f32.mxu0 0.0
  %959 = vmatmul.mubr.f32.gmra.mxu0 %v880
  %v960 = vpop.f32.mrf.mxu0
  %v961 = vadd.f32 0.0, %v960
  %v962 = vpop.f32.mrf.mxu0
  %v963 = vadd.f32 0.0, %v962
  %964 = vdwg.mxu0
  %965 = vmatprep.subr.mxu0 0.0
  %966 = vmatpush1.msra.mxu0 0.0
  %967 = vmatprep.subr.mxu0 0.0
  %968 = vmatpush1.msra.mxu0 0.0
  %969 = vmatprep.subr.mxu0 0.0
  %970 = vmatpush1.msra.mxu0 0.0
  %971 = vmatprep.subr.mxu0 0.0
  %972 = vmatpush1.msra.mxu0 0.0
  %973 = vmatprep.subr.mxu0 0.0
  %974 = vmatpush1.msra.mxu0 0.0
  %975 = vmatprep.subr.mxu0 0.0
  %976 = vmatpush1.msra.mxu0 0.0
  %977 = vmatprep.subr.mxu0 0.0
  %978 = vmatpush1.msra.mxu0 0.0
  %979 = vmatprep.subr.mxu0 0.0
  %980 = vmatpush1.msra.mxu0 0.0
  %981 = vmatprep.subr.mxu0 0.0
  %982 = vmatpush1.msra.mxu0 0.0
  %983 = vmatprep.subr.mxu0 0.0
  %984 = vmatpush1.msra.mxu0 0.0
  %985 = vmatprep.subr.mxu0 0.0
  %986 = vmatpush1.msra.mxu0 0.0
  %987 = vmatprep.subr.mxu0 0.0
  %988 = vmatpush1.msra.mxu0 0.0
  %989 = vmatprep.subr.mxu0 0.0
  %990 = vmatpush1.msra.mxu0 0.0
  %991 = vmatprep.subr.mxu0 0.0
  %992 = vmatpush1.msra.mxu0 0.0
  %993 = vmatprep.subr.mxu0 0.0
  %994 = vmatpush1.msra.mxu0 0.0
  %995 = vmatprep.subr.mxu0 %v892
  %996 = vmatpush1.msra.mxu0 %v889
  %997 = vmatprep.subr.mxu0 0.0
  %998 = vmatpush2.msra.mxu0 0.0
  %999 = vmatprep.subr.mxu0 0.0
  %1000 = vmatpush2.msra.mxu0 0.0
  %1001 = vmatprep.subr.mxu0 0.0
  %1002 = vmatpush2.msra.mxu0 0.0
  %1003 = vmatprep.subr.mxu0 0.0
  %1004 = vmatpush2.msra.mxu0 0.0
  %1005 = vmatprep.subr.mxu0 0.0
  %1006 = vmatpush2.msra.mxu0 0.0
  %1007 = vmatprep.subr.mxu0 0.0
  %1008 = vmatpush2.msra.mxu0 0.0
  %1009 = vmatprep.subr.mxu0 0.0
  %1010 = vmatpush2.msra.mxu0 0.0
  %1011 = vmatprep.subr.mxu0 0.0
  %1012 = vmatpush2.msra.mxu0 0.0
  %1013 = vmatprep.subr.mxu0 0.0
  %1014 = vmatpush2.msra.mxu0 0.0
  %1015 = vmatprep.subr.mxu0 0.0
  %1016 = vmatpush2.msra.mxu0 0.0
  %1017 = vmatprep.subr.mxu0 0.0
  %1018 = vmatpush2.msra.mxu0 0.0
  %1019 = vmatprep.subr.mxu0 0.0
  %1020 = vmatpush2.msra.mxu0 0.0
  %1021 = vmatprep.subr.mxu0 0.0
  %1022 = vmatpush2.msra.mxu0 0.0
  %1023 = vmatprep.subr.mxu0 0.0
  %1024 = vmatpush2.msra.mxu0 0.0
  %1025 = vmatprep.subr.mxu0 0.0
  %1026 = vmatpush2.msra.mxu0 0.0
  %1027 = vmatprep.subr.mxu0 0.0
  %1028 = vmatpush2.msra.mxu0 0.0
  %1029 = vmatprep.mubr.f32.mxu0 0.0
  %1030 = vmatmul.mubr.f32.gmra.mxu0 %v880
  %v1031 = vpop.f32.mrf.mxu0
  %v1032 = vadd.f32 0.0, %v1031
  %v1033 = vpop.f32.mrf.mxu0
  %v1034 = vadd.f32 0.0, %v1033
  %1035 = vdwg.mxu0
  %vm1036 = vcmask 48128
  %v1038 = vsel %vm1036, %v118, 0
  %vm1040 = vcmask 1045504
  %v1042 = vsel %vm1040, %v86, 0
  %v1045 = vsel %vm1040, %v87, 0
  %v1048 = vsel %vm1040, %v88, 0
  %v1051 = vsel %vm1040, %v89, 0
  %1053 = vmatprep.subr.mxu0 0.0
  %1054 = vmatpush1.msra.mxu0 0.0
  %1055 = vmatprep.subr.mxu0 0.0
  %1056 = vmatpush1.msra.mxu0 0.0
  %1057 = vmatprep.subr.mxu0 0.0
  %1058 = vmatpush1.msra.mxu0 0.0
  %1059 = vmatprep.subr.mxu0 0.0
  %1060 = vmatpush1.msra.mxu0 0.0
  %1061 = vmatprep.subr.mxu0 0.0
  %1062 = vmatpush1.msra.mxu0 0.0
  %1063 = vmatprep.subr.mxu0 0.0
  %1064 = vmatpush1.msra.mxu0 0.0
  %1065 = vmatprep.subr.mxu0 0.0
  %1066 = vmatpush1.msra.mxu0 0.0
  %1067 = vmatprep.subr.mxu0 0.0
  %1068 = vmatpush1.msra.mxu0 0.0
  %1069 = vmatprep.subr.mxu0 0.0
  %1070 = vmatpush1.msra.mxu0 0.0
  %1071 = vmatprep.subr.mxu0 0.0
  %1072 = vmatpush1.msra.mxu0 0.0
  %1073 = vmatprep.subr.mxu0 0.0
  %1074 = vmatpush1.msra.mxu0 0.0
  %1075 = vmatprep.subr.mxu0 0.0
  %1076 = vmatpush1.msra.mxu0 0.0
  %1077 = vmatprep.subr.mxu0 0.0
  %1078 = vmatpush1.msra.mxu0 0.0
  %1079 = vmatprep.subr.mxu0 0.0
  %1080 = vmatpush1.msra.mxu0 0.0
  %1081 = vmatprep.subr.mxu0 0.0
  %1082 = vmatpush1.msra.mxu0 0.0
  %1083 = vmatprep.subr.mxu0 %v1045
  %1084 = vmatpush1.msra.mxu0 %v1042
  %1085 = vmatprep.subr.mxu0 0.0
  %1086 = vmatpush2.msra.mxu0 0.0
  %1087 = vmatprep.subr.mxu0 0.0
  %1088 = vmatpush2.msra.mxu0 0.0
  %1089 = vmatprep.subr.mxu0 0.0
  %1090 = vmatpush2.msra.mxu0 0.0
  %1091 = vmatprep.subr.mxu0 0.0
  %1092 = vmatpush2.msra.mxu0 0.0
  %1093 = vmatprep.subr.mxu0 0.0
  %1094 = vmatpush2.msra.mxu0 0.0
  %1095 = vmatprep.subr.mxu0 0.0
  %1096 = vmatpush2.msra.mxu0 0.0
  %1097 = vmatprep.subr.mxu0 0.0
  %1098 = vmatpush2.msra.mxu0 0.0
  %1099 = vmatprep.subr.mxu0 0.0
  %1100 = vmatpush2.msra.mxu0 0.0
  %1101 = vmatprep.subr.mxu0 0.0
  %1102 = vmatpush2.msra.mxu0 0.0
  %1103 = vmatprep.subr.mxu0 0.0
  %1104 = vmatpush2.msra.mxu0 0.0
  %1105 = vmatprep.subr.mxu0 0.0
  %1106 = vmatpush2.msra.mxu0 0.0
  %1107 = vmatprep.subr.mxu0 0.0
  %1108 = vmatpush2.msra.mxu0 0.0
  %1109 = vmatprep.subr.mxu0 0.0
  %1110 = vmatpush2.msra.mxu0 0.0
  %1111 = vmatprep.subr.mxu0 0.0
  %1112 = vmatpush2.msra.mxu0 0.0
  %1113 = vmatprep.subr.mxu0 0.0
  %1114 = vmatpush2.msra.mxu0 0.0
  %1115 = vmatprep.subr.mxu0 0.0
  %1116 = vmatpush2.msra.mxu0 0.0
  %1117 = vmatprep.mubr.f32.mxu0 0.0
  %1118 = vmatmul.mubr.f32.gmra.mxu0 %v1038
  %v1119 = vpop.f32.mrf.mxu0
  %v1120 = vadd.f32 %v961, %v1119
  %v1121 = vpop.f32.mrf.mxu0
  %v1122 = vadd.f32 %v963, %v1121
  %1123 = vdwg.mxu0
  %1124 = vmatprep.subr.mxu0 0.0
  %1125 = vmatpush1.msra.mxu0 0.0
  %1126 = vmatprep.subr.mxu0 0.0
  %1127 = vmatpush1.msra.mxu0 0.0
  %1128 = vmatprep.subr.mxu0 0.0
  %1129 = vmatpush1.msra.mxu0 0.0
  %1130 = vmatprep.subr.mxu0 0.0
  %1131 = vmatpush1.msra.mxu0 0.0
  %1132 = vmatprep.subr.mxu0 0.0
  %1133 = vmatpush1.msra.mxu0 0.0
  %1134 = vmatprep.subr.mxu0 0.0
  %1135 = vmatpush1.msra.mxu0 0.0
  %1136 = vmatprep.subr.mxu0 0.0
  %1137 = vmatpush1.msra.mxu0 0.0
  %1138 = vmatprep.subr.mxu0 0.0
  %1139 = vmatpush1.msra.mxu0 0.0
  %1140 = vmatprep.subr.mxu0 0.0
  %1141 = vmatpush1.msra.mxu0 0.0
  %1142 = vmatprep.subr.mxu0 0.0
  %1143 = vmatpush1.msra.mxu0 0.0
  %1144 = vmatprep.subr.mxu0 0.0
  %1145 = vmatpush1.msra.mxu0 0.0
  %1146 = vmatprep.subr.mxu0 0.0
  %1147 = vmatpush1.msra.mxu0 0.0
  %1148 = vmatprep.subr.mxu0 0.0
  %1149 = vmatpush1.msra.mxu0 0.0
  %1150 = vmatprep.subr.mxu0 0.0
  %1151 = vmatpush1.msra.mxu0 0.0
  %1152 = vmatprep.subr.mxu0 0.0
  %1153 = vmatpush1.msra.mxu0 0.0
  %1154 = vmatprep.subr.mxu0 %v1051
  %1155 = vmatpush1.msra.mxu0 %v1048
  %1156 = vmatprep.subr.mxu0 0.0
  %1157 = vmatpush2.msra.mxu0 0.0
  %1158 = vmatprep.subr.mxu0 0.0
  %1159 = vmatpush2.msra.mxu0 0.0
  %1160 = vmatprep.subr.mxu0 0.0
  %1161 = vmatpush2.msra.mxu0 0.0
  %1162 = vmatprep.subr.mxu0 0.0
  %1163 = vmatpush2.msra.mxu0 0.0
  %1164 = vmatprep.subr.mxu0 0.0
  %1165 = vmatpush2.msra.mxu0 0.0
  %1166 = vmatprep.subr.mxu0 0.0
  %1167 = vmatpush2.msra.mxu0 0.0
  %1168 = vmatprep.subr.mxu0 0.0
  %1169 = vmatpush2.msra.mxu0 0.0
  %1170 = vmatprep.subr.mxu0 0.0
  %1171 = vmatpush2.msra.mxu0 0.0
  %1172 = vmatprep.subr.mxu0 0.0
  %1173 = vmatpush2.msra.mxu0 0.0
  %1174 = vmatprep.subr.mxu0 0.0
  %1175 = vmatpush2.msra.mxu0 0.0
  %1176 = vmatprep.subr.mxu0 0.0
  %1177 = vmatpush2.msra.mxu0 0.0
  %1178 = vmatprep.subr.mxu0 0.0
  %1179 = vmatpush2.msra.mxu0 0.0
  %1180 = vmatprep.subr.mxu0 0.0
  %1181 = vmatpush2.msra.mxu0 0.0
  %1182 = vmatprep.subr.mxu0 0.0
  %1183 = vmatpush2.msra.mxu0 0.0
  %1184 = vmatprep.subr.mxu0 0.0
  %1185 = vmatpush2.msra.mxu0 0.0
  %1186 = vmatprep.subr.mxu0 0.0
  %1187 = vmatpush2.msra.mxu0 0.0
  %1188 = vmatprep.mubr.f32.mxu0 0.0
  %1189 = vmatmul.mubr.f32.gmra.mxu0 %v1038
  %v1190 = vpop.f32.mrf.mxu0
  %v1191 = vadd.f32 %v1032, %v1190
  %v1192 = vpop.f32.mrf.mxu0
  %v1193 = vadd.f32 %v1034, %v1192
  %1194 = vdwg.mxu0
  %v1196 = vlaneseq
  %v1197 = vshrl.u32 %v1196, 7
  %v1198 = vsub.s32 0, %v1197
  %v1199 = vrot.slane %v95, %v1198
  %v1200 = vlaneseq
  %v1201 = vshrl.u32 %v1200, 7
  %v1202 = vsub.s32 1, %v1201
  %v1203 = vrot.slane %v95, %v1202
  %v1204 = vlaneseq
  %v1205 = vshrl.u32 %v1204, 7
  %v1206 = vsub.s32 2, %v1205
  %v1207 = vrot.slane %v95, %v1206
  %v1208 = vlaneseq
  %v1209 = vshrl.u32 %v1208, 7
  %v1210 = vsub.s32 3, %v1209
  %v1211 = vrot.slane %v95, %v1210
  %v1216 = vadd.f32 %v1120, %v1199
  %v1217 = vadd.f32 %v1122, %v1203
  %v1218 = vadd.f32 %v1191, %v1207
  %v1219 = vadd.f32 %v1193, %v1211
  %v1220 = vmul.f32 %v97, 0.0
  %v1221 = vmul.f32 %v99, 0.0
  %v1222 = vadd.f32 %v1220, %v1221
  %v1223 = vmul.f32 %v101, 0.0
  %v1224 = vadd.f32 %v1222, %v1223
  %v1225 = vmul.f32 %v103, 0.0
  %v1226 = vadd.f32 %v1224, %v1225
  %v1227 = vmul.f32 %v105, 0.0
  %v1228 = vadd.f32 %v1226, %v1227
  %v1229 = vmul.f32 %v107, 0.0
  %v1230 = vadd.f32 %v1228, %v1229
  %v1232 = vlaneseq
  %v1233 = vshrl.u32 %v1232, 7
  %v1234 = vsub.s32 0, %v1233
  %v1235 = vrot.slane %v1230, %v1234
  %v1236 = vlaneseq
  %v1237 = vshrl.u32 %v1236, 7
  %v1238 = vsub.s32 1, %v1237
  %v1239 = vrot.slane %v1230, %v1238
  %v1240 = vlaneseq
  %v1241 = vshrl.u32 %v1240, 7
  %v1242 = vsub.s32 2, %v1241
  %v1243 = vrot.slane %v1230, %v1242
  %v1244 = vlaneseq
  %v1245 = vshrl.u32 %v1244, 7
  %v1246 = vsub.s32 3, %v1245
  %v1247 = vrot.slane %v1230, %v1246
  %v1252 = vadd.f32 %v1216, %v1235
  %v1253 = vadd.f32 %v1217, %v1239
  %v1254 = vadd.f32 %v1218, %v1243
  %v1255 = vadd.f32 %v1219, %v1247
  %v1256 = vxor.u32 %v1252, 2147483648
  %v1257 = vmul.f32 %v1256, 1.442695
  %v1258 = vpow.pop %v1257
  %v1259 = vadd.f32 %v1258, 1.0
  %v1260 = vrcp.pop %v1259
  %v1261 = vmul.f32 1.0, %v1260
  %v1262 = vxor.u32 %v1253, 2147483648
  %v1263 = vmul.f32 %v1262, 1.442695
  %v1264 = vpow.pop %v1263
  %v1265 = vadd.f32 %v1264, 1.0
  %v1266 = vrcp.pop %v1265
  %v1267 = vmul.f32 1.0, %v1266
  %v1268 = vtanh.pop %v1254
  %v1269 = vxor.u32 %v1255, 2147483648
  %v1270 = vmul.f32 %v1269, 1.442695
  %v1271 = vpow.pop %v1270
  %v1272 = vadd.f32 %v1271, 1.0
  %v1273 = vrcp.pop %v1272
  %v1274 = vmul.f32 1.0, %v1273
  %v1275 = vmul.f32 %v1267, 0.0
  %v1276 = vmul.f32 %v1261, %v1268
  %v1277 = vadd.f32 %v1275, %v1276
  %v1278 = vtanh.pop %v1277
  %v1279 = vmul.f32 %v1274, %v1278
  %1281 = vset.pattern.permute.xlu0 0
  %1282 = vperm.xlu0 %1281, %v1279
  %v1283 = vpop.permute.xlu0 %1282
  %v1286 = vlaneseq
  %v1287 = vshrl.u32 %v1286, 7
  %v1288 = vsub.s32 0, %v1287
  %v1289 = vrot.slane %v97, %v1288
  %v1290 = vlaneseq
  %v1291 = vshrl.u32 %v1290, 7
  %v1292 = vsub.s32 1, %v1291
  %v1293 = vrot.slane %v97, %v1292
  %v1294 = vlaneseq
  %v1295 = vshrl.u32 %v1294, 7
  %v1296 = vsub.s32 2, %v1295
  %v1297 = vrot.slane %v97, %v1296
  %v1298 = vlaneseq
  %v1299 = vshrl.u32 %v1298, 7
  %v1300 = vsub.s32 3, %v1299
  %v1301 = vrot.slane %v97, %v1300
  %v1306 = vmul.f32 %v1283, %v1289
  %v1307 = vmul.f32 %v1283, %v1293
  %v1308 = vmul.f32 %v1283, %v1297
  %v1309 = vmul.f32 %v1283, %v1301
  %1310 = vset.pattern.permute.xlu0 1
  %1311 = vperm.xlu0 %1310, %v1279
  %v1312 = vpop.permute.xlu0 %1311
  %v1315 = vlaneseq
  %v1316 = vshrl.u32 %v1315, 7
  %v1317 = vsub.s32 0, %v1316
  %v1318 = vrot.slane %v99, %v1317
  %v1319 = vlaneseq
  %v1320 = vshrl.u32 %v1319, 7
  %v1321 = vsub.s32 1, %v1320
  %v1322 = vrot.slane %v99, %v1321
  %v1323 = vlaneseq
  %v1324 = vshrl.u32 %v1323, 7
  %v1325 = vsub.s32 2, %v1324
  %v1326 = vrot.slane %v99, %v1325
  %v1327 = vlaneseq
  %v1328 = vshrl.u32 %v1327, 7
  %v1329 = vsub.s32 3, %v1328
  %v1330 = vrot.slane %v99, %v1329
  %v1335 = vmul.f32 %v1312, %v1318
  %v1336 = vmul.f32 %v1312, %v1322
  %v1337 = vmul.f32 %v1312, %v1326
  %v1338 = vmul.f32 %v1312, %v1330
  %v1339 = vadd.f32 %v1306, %v1335
  %v1340 = vadd.f32 %v1307, %v1336
  %v1341 = vadd.f32 %v1308, %v1337
  %v1342 = vadd.f32 %v1309, %v1338
  %1343 = vset.pattern.permute.xlu0 2
  %1344 = vperm.xlu0 %1343, %v1279
  %v1345 = vpop.permute.xlu0 %1344
  %v1348 = vlaneseq
  %v1349 = vshrl.u32 %v1348, 7
  %v1350 = vsub.s32 0, %v1349
  %v1351 = vrot.slane %v101, %v1350
  %v1352 = vlaneseq
  %v1353 = vshrl.u32 %v1352, 7
  %v1354 = vsub.s32 1, %v1353
  %v1355 = vrot.slane %v101, %v1354
  %v1356 = vlaneseq
  %v1357 = vshrl.u32 %v1356, 7
  %v1358 = vsub.s32 2, %v1357
  %v1359 = vrot.slane %v101, %v1358
  %v1360 = vlaneseq
  %v1361 = vshrl.u32 %v1360, 7
  %v1362 = vsub.s32 3, %v1361
  %v1363 = vrot.slane %v101, %v1362
  %v1368 = vmul.f32 %v1345, %v1351
  %v1369 = vmul.f32 %v1345, %v1355
  %v1370 = vmul.f32 %v1345, %v1359
  %v1371 = vmul.f32 %v1345, %v1363
  %v1372 = vadd.f32 %v1339, %v1368
  %v1373 = vadd.f32 %v1340, %v1369
  %v1374 = vadd.f32 %v1341, %v1370
  %v1375 = vadd.f32 %v1342, %v1371
  %1376 = vset.pattern.permute.xlu0 3
  %1377 = vperm.xlu0 %1376, %v1279
  %v1378 = vpop.permute.xlu0 %1377
  %v1381 = vlaneseq
  %v1382 = vshrl.u32 %v1381, 7
  %v1383 = vsub.s32 0, %v1382
  %v1384 = vrot.slane %v103, %v1383
  %v1385 = vlaneseq
  %v1386 = vshrl.u32 %v1385, 7
  %v1387 = vsub.s32 1, %v1386
  %v1388 = vrot.slane %v103, %v1387
  %v1389 = vlaneseq
  %v1390 = vshrl.u32 %v1389, 7
  %v1391 = vsub.s32 2, %v1390
  %v1392 = vrot.slane %v103, %v1391
  %v1393 = vlaneseq
  %v1394 = vshrl.u32 %v1393, 7
  %v1395 = vsub.s32 3, %v1394
  %v1396 = vrot.slane %v103, %v1395
  %v1401 = vmul.f32 %v1378, %v1384
  %v1402 = vmul.f32 %v1378, %v1388
  %v1403 = vmul.f32 %v1378, %v1392
  %v1404 = vmul.f32 %v1378, %v1396
  %v1405 = vadd.f32 %v1372, %v1401
  %v1406 = vadd.f32 %v1373, %v1402
  %v1407 = vadd.f32 %v1374, %v1403
  %v1408 = vadd.f32 %v1375, %v1404
  %1409 = vset.pattern.permute.xlu0 4
  %1410 = vperm.xlu0 %1409, %v1279
  %v1411 = vpop.permute.xlu0 %1410
  %v1414 = vlaneseq
  %v1415 = vshrl.u32 %v1414, 7
  %v1416 = vsub.s32 0, %v1415
  %v1417 = vrot.slane %v105, %v1416
  %v1418 = vlaneseq
  %v1419 = vshrl.u32 %v1418, 7
  %v1420 = vsub.s32 1, %v1419
  %v1421 = vrot.slane %v105, %v1420
  %v1422 = vlaneseq
  %v1423 = vshrl.u32 %v1422, 7
  %v1424 = vsub.s32 2, %v1423
  %v1425 = vrot.slane %v105, %v1424
  %v1426 = vlaneseq
  %v1427 = vshrl.u32 %v1426, 7
  %v1428 = vsub.s32 3, %v1427
  %v1429 = vrot.slane %v105, %v1428
  %v1434 = vmul.f32 %v1411, %v1417
  %v1435 = vmul.f32 %v1411, %v1421
  %v1436 = vmul.f32 %v1411, %v1425
  %v1437 = vmul.f32 %v1411, %v1429
  %v1438 = vadd.f32 %v1405, %v1434
  %v1439 = vadd.f32 %v1406, %v1435
  %v1440 = vadd.f32 %v1407, %v1436
  %v1441 = vadd.f32 %v1408, %v1437
  %1442 = vset.pattern.permute.xlu0 5
  %1443 = vperm.xlu0 %1442, %v1279
  %v1444 = vpop.permute.xlu0 %1443
  %v1447 = vlaneseq
  %v1448 = vshrl.u32 %v1447, 7
  %v1449 = vsub.s32 0, %v1448
  %v1450 = vrot.slane %v107, %v1449
  %v1451 = vlaneseq
  %v1452 = vshrl.u32 %v1451, 7
  %v1453 = vsub.s32 1, %v1452
  %v1454 = vrot.slane %v107, %v1453
  %v1455 = vlaneseq
  %v1456 = vshrl.u32 %v1455, 7
  %v1457 = vsub.s32 2, %v1456
  %v1458 = vrot.slane %v107, %v1457
  %v1459 = vlaneseq
  %v1460 = vshrl.u32 %v1459, 7
  %v1461 = vsub.s32 3, %v1460
  %v1462 = vrot.slane %v107, %v1461
  %v1467 = vmul.f32 %v1444, %v1450
  %v1468 = vmul.f32 %v1444, %v1454
  %v1469 = vmul.f32 %v1444, %v1458
  %v1470 = vmul.f32 %v1444, %v1462
  %v1471 = vadd.f32 %v1438, %v1467
  %v1472 = vadd.f32 %v1439, %v1468
  %v1473 = vadd.f32 %v1440, %v1469
  %v1474 = vadd.f32 %v1441, %v1470
  %v1479 = vrot.slane %v1471, 7
  %v1480 = vrot.slane %v1472, 7
  %v1481 = vrot.slane %v1473, 7
  %v1482 = vrot.slane %v1474, 7
  %v1487 = vadd.f32 %v1216, %v1479
  %v1488 = vadd.f32 %v1217, %v1480
  %v1489 = vadd.f32 %v1218, %v1481
  %v1490 = vadd.f32 %v1219, %v1482
  %v1491 = vxor.u32 %v1487, 2147483648
  %v1492 = vmul.f32 %v1491, 1.442695
  %v1493 = vpow.pop %v1492
  %v1494 = vadd.f32 %v1493, 1.0
  %v1495 = vrcp.pop %v1494
  %v1496 = vmul.f32 1.0, %v1495
  %v1497 = vxor.u32 %v1488, 2147483648
  %v1498 = vmul.f32 %v1497, 1.442695
  %v1499 = vpow.pop %v1498
  %v1500 = vadd.f32 %v1499, 1.0
  %v1501 = vrcp.pop %v1500
  %v1502 = vmul.f32 1.0, %v1501
  %v1503 = vtanh.pop %v1489
  %v1504 = vxor.u32 %v1490, 2147483648
  %v1505 = vmul.f32 %v1504, 1.442695
  %v1506 = vpow.pop %v1505
  %v1507 = vadd.f32 %v1506, 1.0
  %v1508 = vrcp.pop %v1507
  %v1509 = vmul.f32 1.0, %v1508
  %v1511 = vrot.slane %v1277, 7
  %v1513 = vmul.f32 %v1502, %v1511
  %v1514 = vmul.f32 %v1496, %v1503
  %v1515 = vadd.f32 %v1513, %v1514
  %v1516 = vtanh.pop %v1515
  %v1517 = vmul.f32 %v1509, %v1516
  %1519 = vset.pattern.permute.xlu0 0
  %1520 = vperm.xlu0 %1519, %v1517
  %v1521 = vpop.permute.xlu0 %1520
  %v1523 = vmul.f32 %v1521, %v1289
  %v1524 = vmul.f32 %v1521, %v1293
  %v1525 = vmul.f32 %v1521, %v1297
  %v1526 = vmul.f32 %v1521, %v1301
  %1527 = vset.pattern.permute.xlu0 1
  %1528 = vperm.xlu0 %1527, %v1517
  %v1529 = vpop.permute.xlu0 %1528
  %v1531 = vmul.f32 %v1529, %v1318
  %v1532 = vmul.f32 %v1529, %v1322
  %v1533 = vmul.f32 %v1529, %v1326
  %v1534 = vmul.f32 %v1529, %v1330
  %v1535 = vadd.f32 %v1523, %v1531
  %v1536 = vadd.f32 %v1524, %v1532
  %v1537 = vadd.f32 %v1525, %v1533
  %v1538 = vadd.f32 %v1526, %v1534
  %1539 = vset.pattern.permute.xlu0 2
  %1540 = vperm.xlu0 %1539, %v1517
  %v1541 = vpop.permute.xlu0 %1540
  %v1543 = vmul.f32 %v1541, %v1351
  %v1544 = vmul.f32 %v1541, %v1355
  %v1545 = vmul.f32 %v1541, %v1359
  %v1546 = vmul.f32 %v1541, %v1363
  %v1547 = vadd.f32 %v1535, %v1543
  %v1548 = vadd.f32 %v1536, %v1544
  %v1549 = vadd.f32 %v1537, %v1545
  %v1550 = vadd.f32 %v1538, %v1546
  %1551 = vset.pattern.permute.xlu0 3
  %1552 = vperm.xlu0 %1551, %v1517
  %v1553 = vpop.permute.xlu0 %1552
  %v1555 = vmul.f32 %v1553, %v1384
  %v1556 = vmul.f32 %v1553, %v1388
  %v1557 = vmul.f32 %v1553, %v1392
  %v1558 = vmul.f32 %v1553, %v1396
  %v1559 = vadd.f32 %v1547, %v1555
  %v1560 = vadd.f32 %v1548, %v1556
  %v1561 = vadd.f32 %v1549, %v1557
  %v1562 = vadd.f32 %v1550, %v1558
  %1563 = vset.pattern.permute.xlu0 4
  %1564 = vperm.xlu0 %1563, %v1517
  %v1565 = vpop.permute.xlu0 %1564
  %v1567 = vmul.f32 %v1565, %v1417
  %v1568 = vmul.f32 %v1565, %v1421
  %v1569 = vmul.f32 %v1565, %v1425
  %v1570 = vmul.f32 %v1565, %v1429
  %v1571 = vadd.f32 %v1559, %v1567
  %v1572 = vadd.f32 %v1560, %v1568
  %v1573 = vadd.f32 %v1561, %v1569
  %v1574 = vadd.f32 %v1562, %v1570
  %1575 = vset.pattern.permute.xlu0 5
  %1576 = vperm.xlu0 %1575, %v1517
  %v1577 = vpop.permute.xlu0 %1576
  %v1579 = vmul.f32 %v1577, %v1450
  %v1580 = vmul.f32 %v1577, %v1454
  %v1581 = vmul.f32 %v1577, %v1458
  %v1582 = vmul.f32 %v1577, %v1462
  %v1583 = vadd.f32 %v1571, %v1579
  %v1584 = vadd.f32 %v1572, %v1580
  %v1585 = vadd.f32 %v1573, %v1581
  %v1586 = vadd.f32 %v1574, %v1582
  %v1591 = vrot.slane %v1583, 7
  %v1592 = vrot.slane %v1584, 7
  %v1593 = vrot.slane %v1585, 7
  %v1594 = vrot.slane %v1586, 7
  %v1599 = vadd.f32 %v1216, %v1591
  %v1600 = vadd.f32 %v1217, %v1592
  %v1601 = vadd.f32 %v1218, %v1593
  %v1602 = vadd.f32 %v1219, %v1594
  %v1603 = vxor.u32 %v1599, 2147483648
  %v1604 = vmul.f32 %v1603, 1.442695
  %v1605 = vpow.pop %v1604
  %v1606 = vadd.f32 %v1605, 1.0
  %v1607 = vrcp.pop %v1606
  %v1608 = vmul.f32 1.0, %v1607
  %v1609 = vxor.u32 %v1600, 2147483648
  %v1610 = vmul.f32 %v1609, 1.442695
  %v1611 = vpow.pop %v1610
  %v1612 = vadd.f32 %v1611, 1.0
  %v1613 = vrcp.pop %v1612
  %v1614 = vmul.f32 1.0, %v1613
  %v1615 = vtanh.pop %v1601
  %v1616 = vxor.u32 %v1602, 2147483648
  %v1617 = vmul.f32 %v1616, 1.442695
  %v1618 = vpow.pop %v1617
  %v1619 = vadd.f32 %v1618, 1.0
  %v1620 = vrcp.pop %v1619
  %v1621 = vmul.f32 1.0, %v1620
  %v1623 = vrot.slane %v1515, 7
  %v1625 = vmul.f32 %v1614, %v1623
  %v1626 = vmul.f32 %v1608, %v1615
  %v1627 = vadd.f32 %v1625, %v1626
  %v1628 = vtanh.pop %v1627
  %v1629 = vmul.f32 %v1621, %v1628
  %1631 = vset.pattern.permute.xlu0 0
  %1632 = vperm.xlu0 %1631, %v1629
  %v1633 = vpop.permute.xlu0 %1632
  %v1635 = vmul.f32 %v1633, %v1289
  %v1636 = vmul.f32 %v1633, %v1293
  %v1637 = vmul.f32 %v1633, %v1297
  %v1638 = vmul.f32 %v1633, %v1301
  %1639 = vset.pattern.permute.xlu0 1
  %1640 = vperm.xlu0 %1639, %v1629
  %v1641 = vpop.permute.xlu0 %1640
  %v1643 = vmul.f32 %v1641, %v1318
  %v1644 = vmul.f32 %v1641, %v1322
  %v1645 = vmul.f32 %v1641, %v1326
  %v1646 = vmul.f32 %v1641, %v1330
  %v1647 = vadd.f32 %v1635, %v1643
  %v1648 = vadd.f32 %v1636, %v1644
  %v1649 = vadd.f32 %v1637, %v1645
  %v1650 = vadd.f32 %v1638, %v1646
  %1651 = vset.pattern.permute.xlu0 2
  %1652 = vperm.xlu0 %1651, %v1629
  %v1653 = vpop.permute.xlu0 %1652
  %v1655 = vmul.f32 %v1653, %v1351
  %v1656 = vmul.f32 %v1653, %v1355
  %v1657 = vmul.f32 %v1653, %v1359
  %v1658 = vmul.f32 %v1653, %v1363
  %v1659 = vadd.f32 %v1647, %v1655
  %v1660 = vadd.f32 %v1648, %v1656
  %v1661 = vadd.f32 %v1649, %v1657
  %v1662 = vadd.f32 %v1650, %v1658
  %1663 = vset.pattern.permute.xlu0 3
  %1664 = vperm.xlu0 %1663, %v1629
  %v1665 = vpop.permute.xlu0 %1664
  %v1667 = vmul.f32 %v1665, %v1384
  %v1668 = vmul.f32 %v1665, %v1388
  %v1669 = vmul.f32 %v1665, %v1392
  %v1670 = vmul.f32 %v1665, %v1396
  %v1671 = vadd.f32 %v1659, %v1667
  %v1672 = vadd.f32 %v1660, %v1668
  %v1673 = vadd.f32 %v1661, %v1669
  %v1674 = vadd.f32 %v1662, %v1670
  %1675 = vset.pattern.permute.xlu0 4
  %1676 = vperm.xlu0 %1675, %v1629
  %v1677 = vpop.permute.xlu0 %1676
  %v1679 = vmul.f32 %v1677, %v1417
  %v1680 = vmul.f32 %v1677, %v1421
  %v1681 = vmul.f32 %v1677, %v1425
  %v1682 = vmul.f32 %v1677, %v1429
  %v1683 = vadd.f32 %v1671, %v1679
  %v1684 = vadd.f32 %v1672, %v1680
  %v1685 = vadd.f32 %v1673, %v1681
  %v1686 = vadd.f32 %v1674, %v1682
  %1687 = vset.pattern.permute.xlu0 5
  %1688 = vperm.xlu0 %1687, %v1629
  %v1689 = vpop.permute.xlu0 %1688
  %v1691 = vmul.f32 %v1689, %v1450
  %v1692 = vmul.f32 %v1689, %v1454
  %v1693 = vmul.f32 %v1689, %v1458
  %v1694 = vmul.f32 %v1689, %v1462
  %v1695 = vadd.f32 %v1683, %v1691
  %v1696 = vadd.f32 %v1684, %v1692
  %v1697 = vadd.f32 %v1685, %v1693
  %v1698 = vadd.f32 %v1686, %v1694
  %v1703 = vrot.slane %v1695, 7
  %v1704 = vrot.slane %v1696, 7
  %v1705 = vrot.slane %v1697, 7
  %v1706 = vrot.slane %v1698, 7
  %v1711 = vadd.f32 %v1216, %v1703
  %v1712 = vadd.f32 %v1217, %v1704
  %v1713 = vadd.f32 %v1218, %v1705
  %v1714 = vadd.f32 %v1219, %v1706
  %v1715 = vxor.u32 %v1711, 2147483648
  %v1716 = vmul.f32 %v1715, 1.442695
  %v1717 = vpow.pop %v1716
  %v1718 = vadd.f32 %v1717, 1.0
  %v1719 = vrcp.pop %v1718
  %v1720 = vmul.f32 1.0, %v1719
  %v1721 = vxor.u32 %v1712, 2147483648
  %v1722 = vmul.f32 %v1721, 1.442695
  %v1723 = vpow.pop %v1722
  %v1724 = vadd.f32 %v1723, 1.0
  %v1725 = vrcp.pop %v1724
  %v1726 = vmul.f32 1.0, %v1725
  %v1727 = vtanh.pop %v1713
  %v1728 = vxor.u32 %v1714, 2147483648
  %v1729 = vmul.f32 %v1728, 1.442695
  %v1730 = vpow.pop %v1729
  %v1731 = vadd.f32 %v1730, 1.0
  %v1732 = vrcp.pop %v1731
  %v1733 = vmul.f32 1.0, %v1732
  %v1735 = vrot.slane %v1627, 7
  %v1737 = vmul.f32 %v1726, %v1735
  %v1738 = vmul.f32 %v1720, %v1727
  %v1739 = vadd.f32 %v1737, %v1738
  %v1740 = vtanh.pop %v1739
  %v1741 = vmul.f32 %v1733, %v1740
  %1743 = vset.pattern.permute.xlu0 0
  %1744 = vperm.xlu0 %1743, %v1741
  %v1745 = vpop.permute.xlu0 %1744
  %v1747 = vmul.f32 %v1745, %v1289
  %v1748 = vmul.f32 %v1745, %v1293
  %v1749 = vmul.f32 %v1745, %v1297
  %v1750 = vmul.f32 %v1745, %v1301
  %1751 = vset.pattern.permute.xlu0 1
  %1752 = vperm.xlu0 %1751, %v1741
  %v1753 = vpop.permute.xlu0 %1752
  %v1755 = vmul.f32 %v1753, %v1318
  %v1756 = vmul.f32 %v1753, %v1322
  %v1757 = vmul.f32 %v1753, %v1326
  %v1758 = vmul.f32 %v1753, %v1330
  %v1759 = vadd.f32 %v1747, %v1755
  %v1760 = vadd.f32 %v1748, %v1756
  %v1761 = vadd.f32 %v1749, %v1757
  %v1762 = vadd.f32 %v1750, %v1758
  %1763 = vset.pattern.permute.xlu0 2
  %1764 = vperm.xlu0 %1763, %v1741
  %v1765 = vpop.permute.xlu0 %1764
  %v1767 = vmul.f32 %v1765, %v1351
  %v1768 = vmul.f32 %v1765, %v1355
  %v1769 = vmul.f32 %v1765, %v1359
  %v1770 = vmul.f32 %v1765, %v1363
  %v1771 = vadd.f32 %v1759, %v1767
  %v1772 = vadd.f32 %v1760, %v1768
  %v1773 = vadd.f32 %v1761, %v1769
  %v1774 = vadd.f32 %v1762, %v1770
  %1775 = vset.pattern.permute.xlu0 3
  %1776 = vperm.xlu0 %1775, %v1741
  %v1777 = vpop.permute.xlu0 %1776
  %v1779 = vmul.f32 %v1777, %v1384
  %v1780 = vmul.f32 %v1777, %v1388
  %v1781 = vmul.f32 %v1777, %v1392
  %v1782 = vmul.f32 %v1777, %v1396
  %v1783 = vadd.f32 %v1771, %v1779
  %v1784 = vadd.f32 %v1772, %v1780
  %v1785 = vadd.f32 %v1773, %v1781
  %v1786 = vadd.f32 %v1774, %v1782
  %1787 = vset.pattern.permute.xlu0 4
  %1788 = vperm.xlu0 %1787, %v1741
  %v1789 = vpop.permute.xlu0 %1788
  %v1791 = vmul.f32 %v1789, %v1417
  %v1792 = vmul.f32 %v1789, %v1421
  %v1793 = vmul.f32 %v1789, %v1425
  %v1794 = vmul.f32 %v1789, %v1429
  %v1795 = vadd.f32 %v1783, %v1791
  %v1796 = vadd.f32 %v1784, %v1792
  %v1797 = vadd.f32 %v1785, %v1793
  %v1798 = vadd.f32 %v1786, %v1794
  %1799 = vset.pattern.permute.xlu0 5
  %1800 = vperm.xlu0 %1799, %v1741
  %v1801 = vpop.permute.xlu0 %1800
  %v1803 = vmul.f32 %v1801, %v1450
  %v1804 = vmul.f32 %v1801, %v1454
  %v1805 = vmul.f32 %v1801, %v1458
  %v1806 = vmul.f32 %v1801, %v1462
  %v1807 = vadd.f32 %v1795, %v1803
  %v1808 = vadd.f32 %v1796, %v1804
  %v1809 = vadd.f32 %v1797, %v1805
  %v1810 = vadd.f32 %v1798, %v1806
  %v1815 = vrot.slane %v1807, 7
  %v1816 = vrot.slane %v1808, 7
  %v1817 = vrot.slane %v1809, 7
  %v1818 = vrot.slane %v1810, 7
  %v1823 = vadd.f32 %v1216, %v1815
  %v1824 = vadd.f32 %v1217, %v1816
  %v1825 = vadd.f32 %v1218, %v1817
  %v1826 = vadd.f32 %v1219, %v1818
  %v1827 = vxor.u32 %v1823, 2147483648
  %v1828 = vmul.f32 %v1827, 1.442695
  %v1829 = vpow.pop %v1828
  %v1830 = vadd.f32 %v1829, 1.0
  %v1831 = vrcp.pop %v1830
  %v1832 = vmul.f32 1.0, %v1831
  %v1833 = vxor.u32 %v1824, 2147483648
  %v1834 = vmul.f32 %v1833, 1.442695
  %v1835 = vpow.pop %v1834
  %v1836 = vadd.f32 %v1835, 1.0
  %v1837 = vrcp.pop %v1836
  %v1838 = vmul.f32 1.0, %v1837
  %v1839 = vtanh.pop %v1825
  %v1840 = vxor.u32 %v1826, 2147483648
  %v1841 = vmul.f32 %v1840, 1.442695
  %v1842 = vpow.pop %v1841
  %v1843 = vadd.f32 %v1842, 1.0
  %v1844 = vrcp.pop %v1843
  %v1845 = vmul.f32 1.0, %v1844
  %v1847 = vrot.slane %v1739, 7
  %v1849 = vmul.f32 %v1838, %v1847
  %v1850 = vmul.f32 %v1832, %v1839
  %v1851 = vadd.f32 %v1849, %v1850
  %v1852 = vtanh.pop %v1851
  %v1853 = vmul.f32 %v1845, %v1852
  %vm1854 = vcmask 1040384
  %v1855 = vsel %vm1854, %v1279, %v1517
  %vm1856 = vcmask 1041408
  %v1857 = vsel %vm1856, %v1855, %v1629
  %v1858 = vsel %vm165, %v1857, %v1741
  %vm1859 = vcmask 1043456
  %v1860 = vsel %vm1859, %v1858, %v1853
  %vm1861 = vcmask 1044480
  %v1862 = vsel %vm1861, %v1860, 0.0
  %v1864 = vsel %vm1036, %v1862, 0
  %v1867 = vsel %vm1040, %v108, 0
  %1869 = vmatprep.subr.mxu0 0.0
  %1870 = vmatpush1.msra.mxu0 0.0
  %1871 = vmatprep.subr.mxu0 0.0
  %1872 = vmatpush1.msra.mxu0 0.0
  %1873 = vmatprep.subr.mxu0 0.0
  %1874 = vmatpush1.msra.mxu0 0.0
  %1875 = vmatprep.subr.mxu0 0.0
  %1876 = vmatpush1.msra.mxu0 0.0
  %1877 = vmatprep.subr.mxu0 0.0
  %1878 = vmatpush1.msra.mxu0 0.0
  %1879 = vmatprep.subr.mxu0 0.0
  %1880 = vmatpush1.msra.mxu0 0.0
  %1881 = vmatprep.subr.mxu0 0.0
  %1882 = vmatpush1.msra.mxu0 0.0
  %1883 = vmatprep.subr.mxu0 0.0
  %1884 = vmatpush1.msra.mxu0 0.0
  %1885 = vmatprep.subr.mxu0 0.0
  %1886 = vmatpush1.msra.mxu0 0.0
  %1887 = vmatprep.subr.mxu0 0.0
  %1888 = vmatpush1.msra.mxu0 0.0
  %1889 = vmatprep.subr.mxu0 0.0
  %1890 = vmatpush1.msra.mxu0 0.0
  %1891 = vmatprep.subr.mxu0 0.0
  %1892 = vmatpush1.msra.mxu0 0.0
  %1893 = vmatprep.subr.mxu0 0.0
  %1894 = vmatpush1.msra.mxu0 0.0
  %1895 = vmatprep.subr.mxu0 0.0
  %1896 = vmatpush1.msra.mxu0 0.0
  %1897 = vmatprep.subr.mxu0 0.0
  %1898 = vmatpush1.msra.mxu0 0.0
  %1899 = vmatprep.subr.mxu0 0.0
  %1900 = vmatpush1.msra.mxu0 %v1867
  %1901 = vmatprep.subr.mxu0 0.0
  %1902 = vmatpush2.msra.mxu0 0.0
  %1903 = vmatprep.subr.mxu0 0.0
  %1904 = vmatpush2.msra.mxu0 0.0
  %1905 = vmatprep.subr.mxu0 0.0
  %1906 = vmatpush2.msra.mxu0 0.0
  %1907 = vmatprep.subr.mxu0 0.0
  %1908 = vmatpush2.msra.mxu0 0.0
  %1909 = vmatprep.subr.mxu0 0.0
  %1910 = vmatpush2.msra.mxu0 0.0
  %1911 = vmatprep.subr.mxu0 0.0
  %1912 = vmatpush2.msra.mxu0 0.0
  %1913 = vmatprep.subr.mxu0 0.0
  %1914 = vmatpush2.msra.mxu0 0.0
  %1915 = vmatprep.subr.mxu0 0.0
  %1916 = vmatpush2.msra.mxu0 0.0
  %1917 = vmatprep.subr.mxu0 0.0
  %1918 = vmatpush2.msra.mxu0 0.0
  %1919 = vmatprep.subr.mxu0 0.0
  %1920 = vmatpush2.msra.mxu0 0.0
  %1921 = vmatprep.subr.mxu0 0.0
  %1922 = vmatpush2.msra.mxu0 0.0
  %1923 = vmatprep.subr.mxu0 0.0
  %1924 = vmatpush2.msra.mxu0 0.0
  %1925 = vmatprep.subr.mxu0 0.0
  %1926 = vmatpush2.msra.mxu0 0.0
  %1927 = vmatprep.subr.mxu0 0.0
  %1928 = vmatpush2.msra.mxu0 0.0
  %1929 = vmatprep.subr.mxu0 0.0
  %1930 = vmatpush2.msra.mxu0 0.0
  %1931 = vmatprep.subr.mxu0 0.0
  %1932 = vmatpush2.msra.mxu0 0.0
  %1933 = vmatprep.mubr.f32.mxu0 0.0
  %1934 = vmatmul.mubr.f32.gmra.mxu0 %v1864
  %v1935 = vpop.f32.mrf.mxu0
  %v1936 = vadd.f32 %v109, %v1935
  %v1937 = vpop.f32.mrf.mxu0
  %1938 = vdwg.mxu0
  %v1939 = vlaneseq
  %v1940 = vand.u32 %v1939, 127
  %vm1941 = vcmp.lt.s32.totalorder %v1940, 3
  %v1942 = vsel %vm1941, %v1936, -1e+30
  %1943 = vmax.xlane.f32.xlu0 %v1942
  %v1944 = vpop.xlane.xlu0 %1943
  %v1945 = vsub.f32 %v1942, %v1944
  %v1946 = vmul.f32 %v1945, 1.442695
  %v1947 = vpow.pop %v1946
  %1948 = vadd.xlane.f32.xlu0 %v1947
  %v1949 = vpop.xlane.xlu0 %1948
  %v1950 = vlog2.pop %v1949
  %v1951 = vmul.f32 %v1950, 0.6931472
  %v1952 = vadd.f32 %v1944, %v1951
  %v1953 = vsub.f32 %v1936, %v1952
  %1954 = vst [vmem:[%s2] sm:$0xff] %v1953
  // Predicated region
  $region10: #{lstm_tagger_forward.1} parent=0 // pred_check
    _
  $region11: #{lstm_tagger_forward.1} parent=0 // pred_check_branch
    %1956 = sbr.rel (0) target = $region13
  $region12: #{lstm_tagger_forward.1} parent=0 // pred_region
    _
  $region13: #{lstm_tagger_forward.1} parent=0 // pred_fallthru
    _
  // Predicated region
  $region14: #{lstm_tagger_forward.1} parent=0 // pred_check
    _
  $region15: #{lstm_tagger_forward.1} parent=0 // pred_check_branch
    %1958 = sbr.rel (0) target = $region17
  $region16: #{lstm_tagger_forward.1} parent=0 // pred_region
    _
  $region17: #{lstm_tagger_forward.1} parent=0 // pred_fallthru
    _

</llo_original>
